<compile_context>
chip_gen: v6e
topology: v6e:2x2x1
jax: 0.10.0
libtpu: 0.0.40
codegen_flags: <defaults>
</compile_context>

<pallas_src>
import jax
import jax.numpy as jnp
from jax.experimental import pallas as pl
from jax.experimental.pallas import tpu as pltpu

EPS = 1e-5  # PyTorch LayerNorm default


def _layernorm(x, gamma, beta):
    # Two-pass moments (mean, then mean((x-mu)^2)) -- matches the reference
    # exactly and avoids E[x^2]-E[x]^2 cancellation for large-mean inputs.
    mu = jnp.mean(x, axis=-1, keepdims=True)
    xc = x - mu
    var = jnp.mean(xc * xc, axis=-1, keepdims=True)
    return xc * jax.lax.rsqrt(var + EPS) * gamma + beta


def fnet_kernel(x_ref, g1_ref, b1_ref, g2_ref, b2_ref,
                cd_ref, sd_ref, kc_ref, ks_ref, w_ref, bias_ref, o_ref):
    S, TB, D = x_ref.shape
    M = S * TB

    # (S, TB, D) -> (M, D): with TB % 8 == 0 and D as the full last dim this
    # merge never crosses an (8, 128) tile boundary, so the reshape is free.
    x = x_ref[...].reshape(M, D)

    # ---- LayerNorm 1 (f32 VPU math) ----
    y = _layernorm(x, g1_ref[...], b1_ref[...])
    y16 = y.astype(jnp.bfloat16)

    # ---- embed-direction DFT: real / imag parts (bf16 MXU, f32 acc) ----
    yr = jnp.dot(y16, cd_ref[...], preferred_element_type=jnp.float32)
    ys = jnp.dot(y16, sd_ref[...], preferred_element_type=jnp.float32)

    # ---- seq-direction DFT on the flattened rows: left-multiply by
    #      kron(cos_S, I_TB) / kron(sin_S, I_TB).  Re(F) = Kc @ yr - Ks @ ys ----
    re = (jnp.dot(kc_ref[...], yr.astype(jnp.bfloat16),
                  preferred_element_type=jnp.float32)
          - jnp.dot(ks_ref[...], ys.astype(jnp.bfloat16),
                    preferred_element_type=jnp.float32))

    # ---- residual 1, LayerNorm 2, PHM projection, residual 2 ----
    r = re + x
    z = _layernorm(r, g2_ref[...], b2_ref[...])
    out = (jnp.dot(z.astype(jnp.bfloat16), w_ref[...],
                   preferred_element_type=jnp.float32)
           + bias_ref[...] + r)

    o_ref[...] = out.reshape(S, TB, D)


def dft_mats(n):
    # angle = 2*pi*((j*k) mod n)/n: the integer mod keeps the f32 angle exact.
    if n > 46340:
        raise ValueError("dft_mats: j*k overflows int32 before the mod for n > 46340")
    k = jnp.arange(n, dtype=jnp.int32)
    kk = (k[:, None] * k[None, :]) % n
    ang = kk.astype(jnp.float32) * (2.0 * jnp.pi / n)
    return jnp.cos(ang), jnp.sin(ang)


def _row_budget():
    """(target_rows, max_rows) for the flattened M = S*TB row count.

    v5e MXUs are 128x128 -> M = 128 already fills the M dimension; v6e/v7x
    MXUs are 256x256 -> target 256.  Cap at 512 everywhere so the (M, M)
    kron seq-DFT factors never dominate FLOPs or VMEM.
    """
    try:
        kind = jax.devices()[0].device_kind.lower()
    except Exception:
        kind = ""
    if "v5 lite" in kind or "v5e" in kind or "v5lite" in kind:
        return 128, 512
    return 256, 512


def _pick_tb(batch, seq, target_rows=None, max_rows=None):
    """Batch elements per grid step.

    Must divide the batch and be a multiple of the f32 sublane tile (8) unless
    it covers the whole batch (so the (S, TB, D) block maps cleanly onto
    (8, 128) vregs).  Prefer tiles leaving an even grid of length >= 2 (both
    v7x TensorCores busy), then the smallest tile with S*TB >= target_rows,
    with S*TB capped at max_rows.
    """
    if target_rows is None or max_rows is None:
        t, m = _row_budget()
        target_rows = target_rows if target_rows is not None else t
        max_rows = max_rows if max_rows is not None else m
    cands = [t for t in range(1, batch + 1)
             if batch % t == 0 and (t % 8 == 0 or t == batch)]
    even = [t for t in cands if batch // t >= 2 and (batch // t) % 2 == 0]
    cands = even or cands
    capped = [t for t in cands if seq * t <= max_rows] or [min(cands)]
    hit = [t for t in capped if seq * t >= target_rows]
    return min(hit) if hit else max(capped)


def fnet_forward(embeddings, params, tb=None):
    """embeddings: (S, B, D) float32, same layout as the PyTorch module."""
    S, B, D = embeddings.shape
    g1, b1, g2, b2, W, bias = params
    if tb is None:
        tb = _pick_tb(B, S)
    if B % tb != 0 or not (tb % 8 == 0 or tb == B):
        raise ValueError(f"tb={tb} must divide B={B} and be a multiple of 8 "
                         "(or the whole batch)")
    M = S * tb
    grid = B // tb
    # TODO(synk): pad D to a multiple of 128 for lane-dense stores / full MXU
    # N-K utilization when the embedding dim is not already 128-aligned.

    # Constants: built once, bf16 for the MXU, VMEM-resident across grid steps.
    cS, sS = dft_mats(S)
    cD, sD = dft_mats(D)
    eye = jnp.eye(tb, dtype=jnp.float32)
    kc = jnp.kron(cS, eye).astype(jnp.bfloat16)    # (M, M)
    ks = jnp.kron(sS, eye).astype(jnp.bfloat16)    # (M, M)
    cD16 = cD.astype(jnp.bfloat16)                 # (D, D)
    sD16 = sD.astype(jnp.bfloat16)                 # (D, D)
    w_bf = W.astype(jnp.bfloat16)                  # (D, D)

    # Constant-index operands: single-buffered -- double-buffering a constant
    # only doubles VMEM with zero overlap benefit.
    def const_spec(shape):
        nd = len(shape)
        return pl.BlockSpec(shape, lambda b: (0,) * nd,
                            pipeline_mode=pl.Buffered(1))

    vec_spec = const_spec((1, D))

    # VMEM budget from actual sizes: double-buffered x/out + single constants.
    blk = S * tb * D * 4
    const_bytes = (2 * M * M + 3 * D * D) * 2 + 5 * D * 4
    need = 4 * blk + const_bytes
    vmem_limit = int(min(max(2 * need, 32 << 20), 64 << 20))

    # FLOPs/step: embed DFT (2 dots) + seq DFT (2 dots) + PHM projection.
    flops_step = 6 * M * D * D + 4 * M * M * D
    cost = pl.CostEstimate(
        flops=grid * flops_step,
        transcendentals=grid * 2 * M,              # one rsqrt per LayerNorm row
        bytes_accessed=2 * S * B * D * 4 + const_bytes,
    )

    return pl.pallas_call(
        fnet_kernel,
        out_shape=jax.ShapeDtypeStruct((S, B, D), jnp.float32),
        grid=(grid,),
        in_specs=[
            pl.BlockSpec((S, tb, D), lambda b: (0, b, 0)),   # x, native layout
            vec_spec, vec_spec,                              # gamma1, beta1
            vec_spec, vec_spec,                              # gamma2, beta2
            const_spec((D, D)),                              # cos_D
            const_spec((D, D)),                              # sin_D
            const_spec((M, M)),                              # kron(cos_S, I_TB)
            const_spec((M, M)),                              # kron(sin_S, I_TB)
            const_spec((D, D)),                              # PHM weight
            vec_spec,                                        # PHM bias
        ],
        out_specs=pl.BlockSpec((S, tb, D), lambda b: (0, b, 0)),
        compiler_params=pltpu.CompilerParams(
            dimension_semantics=("parallel",),
            vmem_limit_bytes=vmem_limit,
        ),
        cost_estimate=cost,
    )(embeddings, g1, b1, g2, b2, cD16, sD16, kc, ks, w_bf, bias)


def make_params(key, embed_dim, phm_factor=4):
    """Deterministic synthetic parameters (same shapes as the PyTorch module).

    TODO(synk): the phm module source isn't in the spec; it is modeled as its
    materialized Kronecker-structured (D, D) linear layer plus bias.
    """
    n = phm_factor
    d = embed_dim // n
    k1, k2, k3, k4, k5 = jax.random.split(key, 5)
    A = 0.1 * jax.random.normal(k1, (n, n, n), jnp.float32)
    Sm = 0.1 * jax.random.normal(k2, (n, d, d), jnp.float32)
    W = jnp.einsum('nij,nkl->ikjl', A, Sm).reshape(embed_dim, embed_dim)
    bias = 0.01 * jax.random.normal(k3, (1, embed_dim), jnp.float32)
    g1 = 1.0 + 0.1 * jax.random.normal(k4, (1, embed_dim), jnp.float32)
    b1 = jnp.zeros((1, embed_dim), jnp.float32)
    g2 = 1.0 + 0.1 * jax.random.normal(k5, (1, embed_dim), jnp.float32)
    b2 = jnp.zeros((1, embed_dim), jnp.float32)
    return (g1, b1, g2, b2, W, bias)


def fnet_reference(x, params):
    """Pure-JAX (f32/complex64) reference mirroring the PyTorch forward."""
    g1, b1, g2, b2, W, bias = params

    def ln(v, g, be):
        mu = v.mean(-1, keepdims=True)
        var = ((v - mu) ** 2).mean(-1, keepdims=True)
        return (v - mu) / jnp.sqrt(var + EPS) * g[0] + be[0]

    f = jnp.fft.fft(jnp.fft.fft(ln(x, g1, b1), axis=2), axis=0)
    r = jnp.real(f) + x
    return ln(r, g2, b2) @ W + bias[0] + r


if __name__ == "__main__":
    # (seq, batch, embed): D=128 keeps every store lane-dense (full 128-lane
    # vregs); batch=16 -> tb=8 gives an even grid of 2 steps (both v7x
    # TensorCores busy) with M = S*TB = 64 rows per matmul.
    S, B, D = 8, 16, 128
    key = jax.random.PRNGKey(0)
    kx, kp = jax.random.split(key)
    embeddings = jax.random.normal(kx, (S, B, D), jnp.float32)
    params = make_params(kp, D, phm_factor=4)

    out = jax.block_until_ready(fnet_forward(embeddings, params))
    ref = jax.block_until_ready(fnet_reference(embeddings, params))

    assert out.shape == (S, B, D)
    # bf16 MXU operands (f32 accumulation) => compare at bf16-level tolerance,
    # relative to the output's dynamic range.
    err = float(jnp.max(jnp.abs(out - ref)))
    scale = float(jnp.max(jnp.abs(ref)))
    assert err <= 5e-2 * scale + 1e-3, f"max abs err {err} vs ref scale {scale}"
    print("KERNEL_OK")
</pallas_src>

<mosaic_0001>
module attributes {stable_mosaic.version = 11 : i64} {
  func.func @fnet_kernel(%arg0: i32, %arg1: memref<8x8x128xf32, #tpu.memory_space<vmem>>, %arg2: memref<1x128xf32, #tpu.memory_space<vmem>>, %arg3: memref<1x128xf32, #tpu.memory_space<vmem>>, %arg4: memref<1x128xf32, #tpu.memory_space<vmem>>, %arg5: memref<1x128xf32, #tpu.memory_space<vmem>>, %arg6: memref<128x128xbf16, #tpu.memory_space<vmem>>, %arg7: memref<128x128xbf16, #tpu.memory_space<vmem>>, %arg8: memref<64x64xbf16, #tpu.memory_space<vmem>>, %arg9: memref<64x64xbf16, #tpu.memory_space<vmem>>, %arg10: memref<128x128xbf16, #tpu.memory_space<vmem>>, %arg11: memref<1x128xf32, #tpu.memory_space<vmem>>, %arg12: memref<8x8x128xf32, #tpu.memory_space<vmem>>) attributes {dimension_semantics = [#tpu.dimension_semantics<parallel>], iteration_bounds = array<i64: 2>, scalar_prefetch = 0 : i64, scratch_operands = 0 : i64, tpu.core_type = #tpu.core_type<tc>, window_params = [{transform_indices = @transform_0, window_bounds = array<i64: 8, 8, 128>}, {pipeline_mode = #tpu.pipeline_mode<synchronous>, transform_indices = @transform_1, window_bounds = array<i64: 1, 128>}, {pipeline_mode = #tpu.pipeline_mode<synchronous>, transform_indices = @transform_2, window_bounds = array<i64: 1, 128>}, {pipeline_mode = #tpu.pipeline_mode<synchronous>, transform_indices = @transform_3, window_bounds = array<i64: 1, 128>}, {pipeline_mode = #tpu.pipeline_mode<synchronous>, transform_indices = @transform_4, window_bounds = array<i64: 1, 128>}, {pipeline_mode = #tpu.pipeline_mode<synchronous>, transform_indices = @transform_5, window_bounds = array<i64: 128, 128>}, {pipeline_mode = #tpu.pipeline_mode<synchronous>, transform_indices = @transform_6, window_bounds = array<i64: 128, 128>}, {pipeline_mode = #tpu.pipeline_mode<synchronous>, transform_indices = @transform_7, window_bounds = array<i64: 64, 64>}, {pipeline_mode = #tpu.pipeline_mode<synchronous>, transform_indices = @transform_8, window_bounds = array<i64: 64, 64>}, {pipeline_mode = #tpu.pipeline_mode<synchronous>, transform_indices = @transform_9, window_bounds = array<i64: 128, 128>}, {pipeline_mode = #tpu.pipeline_mode<synchronous>, transform_indices = @transform_10, window_bounds = array<i64: 1, 128>}, {transform_indices = @transform_11, window_bounds = array<i64: 8, 8, 128>}]} {
    %c0 = arith.constant 0 : index
    %c0_0 = arith.constant 0 : index
    %c0_1 = arith.constant 0 : index
    %0 = vector.load %arg1[%c0, %c0_0, %c0_1] : memref<8x8x128xf32, #tpu.memory_space<vmem>>, vector<8x8x128xf32>
    %1 = vector.shape_cast %0 : vector<8x8x128xf32> to vector<64x128xf32>
    %c0_2 = arith.constant 0 : index
    %c0_3 = arith.constant 0 : index
    %2 = vector.load %arg2[%c0_2, %c0_3] : memref<1x128xf32, #tpu.memory_space<vmem>>, vector<1x128xf32>
    %c0_4 = arith.constant 0 : index
    %c0_5 = arith.constant 0 : index
    %3 = vector.load %arg3[%c0_4, %c0_5] : memref<1x128xf32, #tpu.memory_space<vmem>>, vector<1x128xf32>
    %cst = arith.constant dense<0.000000e+00> : vector<64xf32>
    %4 = vector.multi_reduction <add>, %1, %cst [1] : vector<64x128xf32> to vector<64xf32>
    %5 = vector.shape_cast %4 : vector<64xf32> to vector<64x1xf32>
    %cst_6 = arith.constant 1.280000e+02 : f32
    %6 = vector.broadcast %cst_6 : f32 to vector<64x1xf32>
    %7 = arith.divf %5, %6 : vector<64x1xf32>
    %8 = vector.broadcast %7 : vector<64x1xf32> to vector<64x128xf32>
    %9 = arith.subf %1, %8 : vector<64x128xf32>
    %10 = arith.mulf %9, %9 : vector<64x128xf32>
    %cst_7 = arith.constant dense<0.000000e+00> : vector<64xf32>
    %11 = vector.multi_reduction <add>, %10, %cst_7 [1] : vector<64x128xf32> to vector<64xf32>
    %12 = vector.shape_cast %11 : vector<64xf32> to vector<64x1xf32>
    %cst_8 = arith.constant 1.280000e+02 : f32
    %13 = vector.broadcast %cst_8 : f32 to vector<64x1xf32>
    %14 = arith.divf %12, %13 : vector<64x1xf32>
    %cst_9 = arith.constant 9.99999974E-6 : f32
    %15 = vector.broadcast %cst_9 : f32 to vector<64x1xf32>
    %16 = arith.addf %14, %15 : vector<64x1xf32>
    %17 = math.rsqrt %16 : vector<64x1xf32>
    %18 = vector.broadcast %17 : vector<64x1xf32> to vector<64x128xf32>
    %19 = arith.mulf %9, %18 : vector<64x128xf32>
    %20 = vector.broadcast %2 : vector<1x128xf32> to vector<64x128xf32>
    %21 = arith.mulf %19, %20 : vector<64x128xf32>
    %22 = vector.broadcast %3 : vector<1x128xf32> to vector<64x128xf32>
    %23 = arith.addf %21, %22 : vector<64x128xf32>
    %24 = arith.truncf %23 : vector<64x128xf32> to vector<64x128xbf16>
    %c0_10 = arith.constant 0 : index
    %c0_11 = arith.constant 0 : index
    %25 = vector.load %arg6[%c0_10, %c0_11] : memref<128x128xbf16, #tpu.memory_space<vmem>>, vector<128x128xbf16>
    %cst_12 = arith.constant dense<0.000000e+00> : vector<64x128xf32>
    %26 = tpu.matmul %24, %25, %cst_12 {dimension_numbers = #tpu.dot_dimension_numbers<[1], [0], [0], [1], [0, 0, 1, 1], [], []>} : vector<64x128xbf16>, vector<128x128xbf16>, vector<64x128xf32> -> vector<64x128xf32>
    %c0_13 = arith.constant 0 : index
    %c0_14 = arith.constant 0 : index
    %27 = vector.load %arg7[%c0_13, %c0_14] : memref<128x128xbf16, #tpu.memory_space<vmem>>, vector<128x128xbf16>
    %cst_15 = arith.constant dense<0.000000e+00> : vector<64x128xf32>
    %28 = tpu.matmul %24, %27, %cst_15 {dimension_numbers = #tpu.dot_dimension_numbers<[1], [0], [0], [1], [0, 0, 1, 1], [], []>} : vector<64x128xbf16>, vector<128x128xbf16>, vector<64x128xf32> -> vector<64x128xf32>
    %c0_16 = arith.constant 0 : index
    %c0_17 = arith.constant 0 : index
    %29 = vector.load %arg8[%c0_16, %c0_17] : memref<64x64xbf16, #tpu.memory_space<vmem>>, vector<64x64xbf16>
    %30 = arith.truncf %26 : vector<64x128xf32> to vector<64x128xbf16>
    %cst_18 = arith.constant dense<0.000000e+00> : vector<64x128xf32>
    %31 = tpu.matmul %29, %30, %cst_18 {dimension_numbers = #tpu.dot_dimension_numbers<[1], [0], [0], [1], [0, 0, 1, 1], [], []>} : vector<64x64xbf16>, vector<64x128xbf16>, vector<64x128xf32> -> vector<64x128xf32>
    %c0_19 = arith.constant 0 : index
    %c0_20 = arith.constant 0 : index
    %32 = vector.load %arg9[%c0_19, %c0_20] : memref<64x64xbf16, #tpu.memory_space<vmem>>, vector<64x64xbf16>
    %33 = arith.truncf %28 : vector<64x128xf32> to vector<64x128xbf16>
    %cst_21 = arith.constant dense<0.000000e+00> : vector<64x128xf32>
    %34 = tpu.matmul %32, %33, %cst_21 {dimension_numbers = #tpu.dot_dimension_numbers<[1], [0], [0], [1], [0, 0, 1, 1], [], []>} : vector<64x64xbf16>, vector<64x128xbf16>, vector<64x128xf32> -> vector<64x128xf32>
    %35 = arith.subf %31, %34 : vector<64x128xf32>
    %36 = arith.addf %35, %1 : vector<64x128xf32>
    %c0_22 = arith.constant 0 : index
    %c0_23 = arith.constant 0 : index
    %37 = vector.load %arg4[%c0_22, %c0_23] : memref<1x128xf32, #tpu.memory_space<vmem>>, vector<1x128xf32>
    %c0_24 = arith.constant 0 : index
    %c0_25 = arith.constant 0 : index
    %38 = vector.load %arg5[%c0_24, %c0_25] : memref<1x128xf32, #tpu.memory_space<vmem>>, vector<1x128xf32>
    %cst_26 = arith.constant dense<0.000000e+00> : vector<64xf32>
    %39 = vector.multi_reduction <add>, %36, %cst_26 [1] : vector<64x128xf32> to vector<64xf32>
    %40 = vector.shape_cast %39 : vector<64xf32> to vector<64x1xf32>
    %cst_27 = arith.constant 1.280000e+02 : f32
    %41 = vector.broadcast %cst_27 : f32 to vector<64x1xf32>
    %42 = arith.divf %40, %41 : vector<64x1xf32>
    %43 = vector.broadcast %42 : vector<64x1xf32> to vector<64x128xf32>
    %44 = arith.subf %36, %43 : vector<64x128xf32>
    %45 = arith.mulf %44, %44 : vector<64x128xf32>
    %cst_28 = arith.constant dense<0.000000e+00> : vector<64xf32>
    %46 = vector.multi_reduction <add>, %45, %cst_28 [1] : vector<64x128xf32> to vector<64xf32>
    %47 = vector.shape_cast %46 : vector<64xf32> to vector<64x1xf32>
    %cst_29 = arith.constant 1.280000e+02 : f32
    %48 = vector.broadcast %cst_29 : f32 to vector<64x1xf32>
    %49 = arith.divf %47, %48 : vector<64x1xf32>
    %cst_30 = arith.constant 9.99999974E-6 : f32
    %50 = vector.broadcast %cst_30 : f32 to vector<64x1xf32>
    %51 = arith.addf %49, %50 : vector<64x1xf32>
    %52 = math.rsqrt %51 : vector<64x1xf32>
    %53 = vector.broadcast %52 : vector<64x1xf32> to vector<64x128xf32>
    %54 = arith.mulf %44, %53 : vector<64x128xf32>
    %55 = vector.broadcast %37 : vector<1x128xf32> to vector<64x128xf32>
    %56 = arith.mulf %54, %55 : vector<64x128xf32>
    %57 = vector.broadcast %38 : vector<1x128xf32> to vector<64x128xf32>
    %58 = arith.addf %56, %57 : vector<64x128xf32>
    %59 = arith.truncf %58 : vector<64x128xf32> to vector<64x128xbf16>
    %c0_31 = arith.constant 0 : index
    %c0_32 = arith.constant 0 : index
    %60 = vector.load %arg10[%c0_31, %c0_32] : memref<128x128xbf16, #tpu.memory_space<vmem>>, vector<128x128xbf16>
    %cst_33 = arith.constant dense<0.000000e+00> : vector<64x128xf32>
    %61 = tpu.matmul %59, %60, %cst_33 {dimension_numbers = #tpu.dot_dimension_numbers<[1], [0], [0], [1], [0, 0, 1, 1], [], []>} : vector<64x128xbf16>, vector<128x128xbf16>, vector<64x128xf32> -> vector<64x128xf32>
    %c0_34 = arith.constant 0 : index
    %c0_35 = arith.constant 0 : index
    %62 = vector.load %arg11[%c0_34, %c0_35] : memref<1x128xf32, #tpu.memory_space<vmem>>, vector<1x128xf32>
    %63 = vector.broadcast %62 : vector<1x128xf32> to vector<64x128xf32>
    %64 = arith.addf %61, %63 : vector<64x128xf32>
    %65 = arith.addf %64, %36 : vector<64x128xf32>
    %66 = vector.shape_cast %65 : vector<64x128xf32> to vector<8x8x128xf32>
    %c0_36 = arith.constant 0 : index
    %c0_37 = arith.constant 0 : index
    %c0_38 = arith.constant 0 : index
    %67 = vector.load %arg12[%c0_36, %c0_37, %c0_38] : memref<8x8x128xf32, #tpu.memory_space<vmem>>, vector<8x8x128xf32>
    tpu.vector_store %arg12[%c0_36, %c0_37, %c0_38], %66 {strides = array<i32>} : memref<8x8x128xf32, #tpu.memory_space<vmem>>, vector<8x8x128xf32>,
    return
  }
  func.func @transform_0(%arg0: i32) -> (i32, i32, i32) {
    %c0_i32 = arith.constant 0 : i32
    %c0_i32_0 = arith.constant 0 : i32
    %c0_i32_1 = arith.constant 0 : i32
    return %c0_i32, %arg0, %c0_i32_0 : i32, i32, i32
  }
  func.func @transform_1(%arg0: i32) -> (i32, i32) {
    %c0_i32 = arith.constant 0 : i32
    %c0_i32_0 = arith.constant 0 : i32
    %c0_i32_1 = arith.constant 0 : i32
    return %c0_i32, %c0_i32_0 : i32, i32
  }
  func.func @transform_2(%arg0: i32) -> (i32, i32) {
    %c0_i32 = arith.constant 0 : i32
    %c0_i32_0 = arith.constant 0 : i32
    %c0_i32_1 = arith.constant 0 : i32
    return %c0_i32, %c0_i32_0 : i32, i32
  }
  func.func @transform_3(%arg0: i32) -> (i32, i32) {
    %c0_i32 = arith.constant 0 : i32
    %c0_i32_0 = arith.constant 0 : i32
    %c0_i32_1 = arith.constant 0 : i32
    return %c0_i32, %c0_i32_0 : i32, i32
  }
  func.func @transform_4(%arg0: i32) -> (i32, i32) {
    %c0_i32 = arith.constant 0 : i32
    %c0_i32_0 = arith.constant 0 : i32
    %c0_i32_1 = arith.constant 0 : i32
    return %c0_i32, %c0_i32_0 : i32, i32
  }
  func.func @transform_5(%arg0: i32) -> (i32, i32) {
    %c0_i32 = arith.constant 0 : i32
    %c0_i32_0 = arith.constant 0 : i32
    %c0_i32_1 = arith.constant 0 : i32
    return %c0_i32, %c0_i32_0 : i32, i32
  }
  func.func @transform_6(%arg0: i32) -> (i32, i32) {
    %c0_i32 = arith.constant 0 : i32
    %c0_i32_0 = arith.constant 0 : i32
    %c0_i32_1 = arith.constant 0 : i32
    return %c0_i32, %c0_i32_0 : i32, i32
  }
  func.func @transform_7(%arg0: i32) -> (i32, i32) {
    %c0_i32 = arith.constant 0 : i32
    %c0_i32_0 = arith.constant 0 : i32
    %c0_i32_1 = arith.constant 0 : i32
    return %c0_i32, %c0_i32_0 : i32, i32
  }
  func.func @transform_8(%arg0: i32) -> (i32, i32) {
    %c0_i32 = arith.constant 0 : i32
    %c0_i32_0 = arith.constant 0 : i32
    %c0_i32_1 = arith.constant 0 : i32
    return %c0_i32, %c0_i32_0 : i32, i32
  }
  func.func @transform_9(%arg0: i32) -> (i32, i32) {
    %c0_i32 = arith.constant 0 : i32
    %c0_i32_0 = arith.constant 0 : i32
    %c0_i32_1 = arith.constant 0 : i32
    return %c0_i32, %c0_i32_0 : i32, i32
  }
  func.func @transform_10(%arg0: i32) -> (i32, i32) {
    %c0_i32 = arith.constant 0 : i32
    %c0_i32_0 = arith.constant 0 : i32
    %c0_i32_1 = arith.constant 0 : i32
    return %c0_i32, %c0_i32_0 : i32, i32
  }
  func.func @transform_11(%arg0: i32) -> (i32, i32, i32) {
    %c0_i32 = arith.constant 0 : i32
    %c0_i32_0 = arith.constant 0 : i32
    %c0_i32_1 = arith.constant 0 : i32
    return %c0_i32, %arg0, %c0_i32_0 : i32, i32, i32
  }
}

</mosaic_0001>

<llo_original>
// kernel: tpu_custom_call.1
$region0: #{tpu_custom_call.1}
  #allocation0 [shape = 'u32[]', space=smem, size = 0x4, offset = 0x4, fixed_abs, tag = 'smem constant byte address 0x4 - core index']
  #allocation1 [shape = 'u32[144,128]{1,0:T(1,128)}', space=vmem, size = 0x12000, scoped, tag = 'internal scratch']
  %s0 = inlined_call_operand.hbm [shape: f32[8,16,128], index: 0, kind: input, shape index: {}]
  %s1 = inlined_call_operand.vmem [shape: f32[1,128], index: 1, kind: input, shape index: {}]
  %s2 = inlined_call_operand.vmem [shape: f32[1,128], index: 2, kind: input, shape index: {}]
  %s3 = inlined_call_operand.vmem [shape: f32[1,128], index: 3, kind: input, shape index: {}]
  %s4 = inlined_call_operand.vmem [shape: f32[1,128], index: 4, kind: input, shape index: {}]
  %s5 = inlined_call_operand.hbm [shape: bf16[128,128], index: 5, kind: input, shape index: {}]
  %s6 = inlined_call_operand.hbm [shape: bf16[128,128], index: 6, kind: input, shape index: {}]
  %s7 = inlined_call_operand.hbm [shape: bf16[64,64], index: 7, kind: input, shape index: {}]
  %s8 = inlined_call_operand.hbm [shape: bf16[64,64], index: 8, kind: input, shape index: {}]
  %s9 = inlined_call_operand.hbm [shape: bf16[128,128], index: 9, kind: input, shape index: {}]
  %s10 = inlined_call_operand.vmem [shape: f32[1,128], index: 10, kind: input, shape index: {}]
  %s11 = inlined_call_operand.hbm [shape: f32[8,16,128], index: 11, kind: output, shape index: {}]
  %s12 = sld [smem:[#allocation0]]
  $region101: #{tpu_custom_call.1} parent=0
    _
  %s14 = ssub.s32 1, %s12
  %s15 = scalar_select 0, %s14, %s12
  $region1: #{tpu_custom_call.1} parent=0
    #allocation2 [shape = 'u8[65536]{0}', space=vmem, size = 0x10000, scoped, tag = 'input window, operand 0']
    #allocation3 [shape = 's32[2]{0}', space=sflag, size = 0x8, scoped, tag = 'scoped memory for tpu_custom_call.1']
    #allocation4 [shape = 's32[2]{0}', space=sflag, size = 0x8, scoped, tag = 'scoped memory for tpu_custom_call.1']
    #allocation5 [shape = 'u8[32768]{0}', space=vmem, size = 0x8000, scoped, tag = 'input window, operand 5, single buffered']
    #allocation6 [shape = 's32[1]{0}', space=sflag, size = 0x4, scoped, tag = 'scoped memory for tpu_custom_call.1']
    #allocation7 [shape = 'u8[32768]{0}', space=vmem, size = 0x8000, scoped, tag = 'input window, operand 6, single buffered']
    #allocation8 [shape = 'u8[16384]{0}', space=vmem, size = 0x4000, scoped, tag = 'input window, operand 7, single buffered']
    #allocation9 [shape = 's32[1]{0}', space=sflag, size = 0x4, scoped, tag = 'scoped memory for tpu_custom_call.1']
    #allocation10 [shape = 'u8[16384]{0}', space=vmem, size = 0x4000, scoped, tag = 'input window, operand 8, single buffered']
    #allocation11 [shape = 'u8[32768]{0}', space=vmem, size = 0x8000, scoped, tag = 'input window, operand 9, single buffered']
    #allocation12 [shape = 's32[1]{0}', space=sflag, size = 0x4, scoped, tag = 'scoped memory for tpu_custom_call.1']
    #allocation13 [shape = 'u8[65536]{0}', space=vmem, size = 0x10000, scoped, tag = 'output window, operand 0']
    %16 = vsyncpa [#allocation3], 0
    %s17 = scalar_lea.sflag [#allocation3], 1
    %18 = vsyncpa %s17, 0
    %19 = vsyncpa [#allocation6], 0
    %20 = vsyncpa [#allocation9], 0
    %21 = vsyncpa [#allocation12], 0
    %22 = vsyncpa [#allocation4], 0
    %s23 = scalar_lea.sflag [#allocation4], 1
    %24 = vsyncpa %s23, 0
    loop: start=0, step=1, limit=4
    $region2: #{tpu_custom_call.1} parent=1 // loop_pre_header
      _
    $region3: #{tpu_custom_call.1} parent=1 // loop_header
      %s26 = sphi 0, %s30
      %p27 = scmp.ge.s32.totalorder %s26, 4
      %s36 = sphi 0, %s38
      %s39 = sphi 0, %s36
      %s40 = sphi 0, %s39
      %s56 = sphi 0, %s40
      %s60 = sphi 0, %s60
      %s62 = sphi 0, %s60
      %s63 = sphi 0, %s62
      %s77 = sphi 0, %s63
      %s81 = sphi 0, %s81
      %s83 = sphi 0, %s81
      %s84 = sphi 0, %s83
      %s98 = sphi 0, %s84
      %s102 = sphi 0, %s102
      %s104 = sphi 0, %s102
      %s105 = sphi 0, %s104
      %s119 = sphi 0, %s105
      %s123 = sphi 0, %s123
      %s125 = sphi 0, %s123
      %s126 = sphi 0, %s125
      %s140 = sphi 0, %s126
      %s144 = sphi 0, %s144
      %s146 = sphi 0, %s144
      %s147 = sphi 0, %s146
      %s161 = sphi 0, %s147
      %s165 = sphi 0, %s165
      %s167 = sphi 0, %s165
      %s168 = sphi 0, %s167
      %s182 = sphi 0, %s168
      %s186 = sphi 0, %s186
      %s188 = sphi 0, %s186
      %s189 = sphi 0, %s188
      %s203 = sphi 0, %s189
      %s207 = sphi 0, %s207
      %s209 = sphi 0, %s207
      %s210 = sphi 0, %s209
      %s224 = sphi 0, %s210
      %s228 = sphi 0, %s228
      %s230 = sphi 0, %s228
      %s231 = sphi 0, %s230
      %s245 = sphi 0, %s231
      %s249 = sphi 0, %s249
      %s251 = sphi 0, %s249
      %s252 = sphi 0, %s251
      %s266 = sphi 0, %s252
      %s272 = sphi 0, %s274
      %s275 = sphi 0, %s272
      %s276 = sphi 0, %s275
      %s292 = sphi 0, %s276
    $region4: #{tpu_custom_call.1} parent=1 // loop_header_branch
      %29 = sbr.rel (%p27) target = $region8
    $region5: #{tpu_custom_call.1} parent=1 // loop_body
      %s31 = ssub.s32 %s26, 1
      %s32 = ssub.s32 %s26, 2
      %s33 = sadd.s32 %s26, 1
      %s34 = ssub.s32 %s26, %s33
      %p35 = scmp.eq.s32.totalorder %s34, 0
      %s37 = sadd.s32 %s36, 1
      %s38 = scalar_select %p35, %s36, %s37
      %p41 = pneg %p35
      %p42 = scmp.eq.s32.totalorder %s26, 1
      %p43 = por %p41, %p42
      %p44 = scmp.ne.s32.totalorder %s36, %s39
      %p45 = scmp.eq.s32.totalorder %s26, 0
      %p46 = por %p44, %p45
      %p47 = scmp.ne.s32.totalorder %s36, %s39
      %p48 = scmp.eq.s32.totalorder %s31, 1
      %p49 = por %p47, %p48
      %p50 = scmp.ne.s32.totalorder %s39, %s40
      %p51 = scmp.eq.s32.totalorder %s31, 0
      %p52 = por %p50, %p51
      %p53 = scmp.ne.s32.totalorder %s39, %s40
      %p54 = scmp.eq.s32.totalorder %s32, 1
      %p55 = por %p53, %p54
      %p57 = scmp.ne.s32.totalorder %s40, %s56
      %p58 = scmp.eq.s32.totalorder %s32, 0
      %p59 = por %p57, %p58
      %s61 = sadd.s32 %s60, 1
      %p64 = scmp.eq.s32.totalorder %s26, 1
      %p65 = scmp.ne.s32.totalorder %s60, %s62
      %p66 = scmp.eq.s32.totalorder %s26, 0
      %p67 = por %p65, %p66
      %p68 = scmp.ne.s32.totalorder %s60, %s62
      %p69 = scmp.eq.s32.totalorder %s31, 1
      %p70 = por %p68, %p69
      %p71 = scmp.ne.s32.totalorder %s62, %s63
      %p72 = scmp.eq.s32.totalorder %s31, 0
      %p73 = por %p71, %p72
      %p74 = scmp.ne.s32.totalorder %s62, %s63
      %p75 = scmp.eq.s32.totalorder %s32, 1
      %p76 = por %p74, %p75
      %p78 = scmp.ne.s32.totalorder %s63, %s77
      %p79 = scmp.eq.s32.totalorder %s32, 0
      %p80 = por %p78, %p79
      %s82 = sadd.s32 %s81, 1
      %p85 = scmp.eq.s32.totalorder %s26, 1
      %p86 = scmp.ne.s32.totalorder %s81, %s83
      %p87 = scmp.eq.s32.totalorder %s26, 0
      %p88 = por %p86, %p87
      %p89 = scmp.ne.s32.totalorder %s81, %s83
      %p90 = scmp.eq.s32.totalorder %s31, 1
      %p91 = por %p89, %p90
      %p92 = scmp.ne.s32.totalorder %s83, %s84
      %p93 = scmp.eq.s32.totalorder %s31, 0
      %p94 = por %p92, %p93
      %p95 = scmp.ne.s32.totalorder %s83, %s84
      %p96 = scmp.eq.s32.totalorder %s32, 1
      %p97 = por %p95, %p96
      %p99 = scmp.ne.s32.totalorder %s84, %s98
      %p100 = scmp.eq.s32.totalorder %s32, 0
      %p101 = por %p99, %p100
      %s103 = sadd.s32 %s102, 1
      %p106 = scmp.eq.s32.totalorder %s26, 1
      %p107 = scmp.ne.s32.totalorder %s102, %s104
      %p108 = scmp.eq.s32.totalorder %s26, 0
      %p109 = por %p107, %p108
      %p110 = scmp.ne.s32.totalorder %s102, %s104
      %p111 = scmp.eq.s32.totalorder %s31, 1
      %p112 = por %p110, %p111
      %p113 = scmp.ne.s32.totalorder %s104, %s105
      %p114 = scmp.eq.s32.totalorder %s31, 0
      %p115 = por %p113, %p114
      %p116 = scmp.ne.s32.totalorder %s104, %s105
      %p117 = scmp.eq.s32.totalorder %s32, 1
      %p118 = por %p116, %p117
      %p120 = scmp.ne.s32.totalorder %s105, %s119
      %p121 = scmp.eq.s32.totalorder %s32, 0
      %p122 = por %p120, %p121
      %s124 = sadd.s32 %s123, 1
      %p127 = scmp.eq.s32.totalorder %s26, 1
      %p128 = scmp.ne.s32.totalorder %s123, %s125
      %p129 = scmp.eq.s32.totalorder %s26, 0
      %p130 = por %p128, %p129
      %p131 = scmp.ne.s32.totalorder %s123, %s125
      %p132 = scmp.eq.s32.totalorder %s31, 1
      %p133 = por %p131, %p132
      %p134 = scmp.ne.s32.totalorder %s125, %s126
      %p135 = scmp.eq.s32.totalorder %s31, 0
      %p136 = por %p134, %p135
      %p137 = scmp.ne.s32.totalorder %s125, %s126
      %p138 = scmp.eq.s32.totalorder %s32, 1
      %p139 = por %p137, %p138
      %p141 = scmp.ne.s32.totalorder %s126, %s140
      %p142 = scmp.eq.s32.totalorder %s32, 0
      %p143 = por %p141, %p142
      %s145 = sadd.s32 %s144, 1
      %p148 = scmp.eq.s32.totalorder %s26, 1
      %p149 = scmp.ne.s32.totalorder %s144, %s146
      %p150 = scmp.eq.s32.totalorder %s26, 0
      %p151 = por %p149, %p150
      %p152 = scmp.ne.s32.totalorder %s144, %s146
      %p153 = scmp.eq.s32.totalorder %s31, 1
      %p154 = por %p152, %p153
      %p155 = scmp.ne.s32.totalorder %s146, %s147
      %p156 = scmp.eq.s32.totalorder %s31, 0
      %p157 = por %p155, %p156
      %p158 = scmp.ne.s32.totalorder %s146, %s147
      %p159 = scmp.eq.s32.totalorder %s32, 1
      %p160 = por %p158, %p159
      %p162 = scmp.ne.s32.totalorder %s147, %s161
      %p163 = scmp.eq.s32.totalorder %s32, 0
      %p164 = por %p162, %p163
      %s166 = sadd.s32 %s165, 1
      %p169 = scmp.eq.s32.totalorder %s26, 1
      %p170 = scmp.ne.s32.totalorder %s165, %s167
      %p171 = scmp.eq.s32.totalorder %s26, 0
      %p172 = por %p170, %p171
      %p173 = scmp.ne.s32.totalorder %s165, %s167
      %p174 = scmp.eq.s32.totalorder %s31, 1
      %p175 = por %p173, %p174
      %p176 = scmp.ne.s32.totalorder %s167, %s168
      %p177 = scmp.eq.s32.totalorder %s31, 0
      %p178 = por %p176, %p177
      %p179 = scmp.ne.s32.totalorder %s167, %s168
      %p180 = scmp.eq.s32.totalorder %s32, 1
      %p181 = por %p179, %p180
      %p183 = scmp.ne.s32.totalorder %s168, %s182
      %p184 = scmp.eq.s32.totalorder %s32, 0
      %p185 = por %p183, %p184
      %s187 = sadd.s32 %s186, 1
      %p190 = scmp.eq.s32.totalorder %s26, 1
      %p191 = scmp.ne.s32.totalorder %s186, %s188
      %p192 = scmp.eq.s32.totalorder %s26, 0
      %p193 = por %p191, %p192
      %p194 = scmp.ne.s32.totalorder %s186, %s188
      %p195 = scmp.eq.s32.totalorder %s31, 1
      %p196 = por %p194, %p195
      %p197 = scmp.ne.s32.totalorder %s188, %s189
      %p198 = scmp.eq.s32.totalorder %s31, 0
      %p199 = por %p197, %p198
      %p200 = scmp.ne.s32.totalorder %s188, %s189
      %p201 = scmp.eq.s32.totalorder %s32, 1
      %p202 = por %p200, %p201
      %p204 = scmp.ne.s32.totalorder %s189, %s203
      %p205 = scmp.eq.s32.totalorder %s32, 0
      %p206 = por %p204, %p205
      %s208 = sadd.s32 %s207, 1
      %p211 = scmp.eq.s32.totalorder %s26, 1
      %p212 = scmp.ne.s32.totalorder %s207, %s209
      %p213 = scmp.eq.s32.totalorder %s26, 0
      %p214 = por %p212, %p213
      %p215 = scmp.ne.s32.totalorder %s207, %s209
      %p216 = scmp.eq.s32.totalorder %s31, 1
      %p217 = por %p215, %p216
      %p218 = scmp.ne.s32.totalorder %s209, %s210
      %p219 = scmp.eq.s32.totalorder %s31, 0
      %p220 = por %p218, %p219
      %p221 = scmp.ne.s32.totalorder %s209, %s210
      %p222 = scmp.eq.s32.totalorder %s32, 1
      %p223 = por %p221, %p222
      %p225 = scmp.ne.s32.totalorder %s210, %s224
      %p226 = scmp.eq.s32.totalorder %s32, 0
      %p227 = por %p225, %p226
      %s229 = sadd.s32 %s228, 1
      %p232 = scmp.eq.s32.totalorder %s26, 1
      %p233 = scmp.ne.s32.totalorder %s228, %s230
      %p234 = scmp.eq.s32.totalorder %s26, 0
      %p235 = por %p233, %p234
      %p236 = scmp.ne.s32.totalorder %s228, %s230
      %p237 = scmp.eq.s32.totalorder %s31, 1
      %p238 = por %p236, %p237
      %p239 = scmp.ne.s32.totalorder %s230, %s231
      %p240 = scmp.eq.s32.totalorder %s31, 0
      %p241 = por %p239, %p240
      %p242 = scmp.ne.s32.totalorder %s230, %s231
      %p243 = scmp.eq.s32.totalorder %s32, 1
      %p244 = por %p242, %p243
      %p246 = scmp.ne.s32.totalorder %s231, %s245
      %p247 = scmp.eq.s32.totalorder %s32, 0
      %p248 = por %p246, %p247
      %s250 = sadd.s32 %s249, 1
      %p253 = scmp.eq.s32.totalorder %s26, 1
      %p254 = scmp.ne.s32.totalorder %s249, %s251
      %p255 = scmp.eq.s32.totalorder %s26, 0
      %p256 = por %p254, %p255
      %p257 = scmp.ne.s32.totalorder %s249, %s251
      %p258 = scmp.eq.s32.totalorder %s31, 1
      %p259 = por %p257, %p258
      %p260 = scmp.ne.s32.totalorder %s251, %s252
      %p261 = scmp.eq.s32.totalorder %s31, 0
      %p262 = por %p260, %p261
      %p263 = scmp.ne.s32.totalorder %s251, %s252
      %p264 = scmp.eq.s32.totalorder %s32, 1
      %p265 = por %p263, %p264
      %p267 = scmp.ne.s32.totalorder %s252, %s266
      %p268 = scmp.eq.s32.totalorder %s32, 0
      %p269 = por %p267, %p268
      %s270 = ssub.s32 %s26, %s33
      %p271 = scmp.eq.s32.totalorder %s270, 0
      %s273 = sadd.s32 %s272, 1
      %s274 = scalar_select %p271, %s272, %s273
      %p277 = pneg %p271
      %p278 = scmp.eq.s32.totalorder %s26, 1
      %p279 = por %p277, %p278
      %p280 = scmp.ne.s32.totalorder %s272, %s275
      %p281 = scmp.eq.s32.totalorder %s26, 0
      %p282 = por %p280, %p281
      %p283 = scmp.ne.s32.totalorder %s272, %s275
      %p284 = scmp.eq.s32.totalorder %s31, 1
      %p285 = por %p283, %p284
      %p286 = scmp.ne.s32.totalorder %s275, %s276
      %p287 = scmp.eq.s32.totalorder %s31, 0
      %p288 = por %p286, %p287
      %p289 = scmp.ne.s32.totalorder %s275, %s276
      %p290 = scmp.eq.s32.totalorder %s32, 1
      %p291 = por %p289, %p290
      %p293 = scmp.ne.s32.totalorder %s276, %s292
      %p294 = scmp.eq.s32.totalorder %s32, 0
      %p295 = por %p293, %p294
      %p296 = scmp.le.s32.totalorder 1, %s26
      %p297 = scmp.lt.s32.totalorder %s26, 3
      %p298 = pnand %p296, %p297
      %p299 = pneg %p298
      // Predicated region
      $region9: #{tpu_custom_call.1} parent=5 // pred_check
        _
      $region10: #{tpu_custom_call.1} parent=5 // pred_check_branch
        %301 = sbr.rel (%p298) target = $region12
      $region11: #{tpu_custom_call.1} parent=5 // pred_region
        %s302 = ssub.s32 %s26, 1
        // Predicated region
        $region13: #{tpu_custom_call.1} parent=11 // pred_check
          %p303 = pneg %p73
        $region14: #{tpu_custom_call.1} parent=11 // pred_check_branch
          %305 = sbr.rel (%p303) target = $region16
        $region15: #{tpu_custom_call.1} parent=11 // pred_region
          _
        $region16: #{tpu_custom_call.1} parent=11 // pred_fallthru
          _
        // Predicated region
        $region17: #{tpu_custom_call.1} parent=11 // pred_check
          %p306 = pneg %p94
        $region18: #{tpu_custom_call.1} parent=11 // pred_check_branch
          %308 = sbr.rel (%p306) target = $region20
        $region19: #{tpu_custom_call.1} parent=11 // pred_region
          _
        $region20: #{tpu_custom_call.1} parent=11 // pred_fallthru
          _
        // Predicated region
        $region21: #{tpu_custom_call.1} parent=11 // pred_check
          %p309 = pneg %p115
        $region22: #{tpu_custom_call.1} parent=11 // pred_check_branch
          %311 = sbr.rel (%p309) target = $region24
        $region23: #{tpu_custom_call.1} parent=11 // pred_region
          _
        $region24: #{tpu_custom_call.1} parent=11 // pred_fallthru
          _
        // Predicated region
        $region25: #{tpu_custom_call.1} parent=11 // pred_check
          %p312 = pneg %p136
        $region26: #{tpu_custom_call.1} parent=11 // pred_check_branch
          %314 = sbr.rel (%p312) target = $region28
        $region27: #{tpu_custom_call.1} parent=11 // pred_region
          _
        $region28: #{tpu_custom_call.1} parent=11 // pred_fallthru
          _
        // Predicated region
        $region29: #{tpu_custom_call.1} parent=11 // pred_check
          %p315 = pneg %p157
        $region30: #{tpu_custom_call.1} parent=11 // pred_check_branch
          %317 = sbr.rel (%p315) target = $region32
        $region31: #{tpu_custom_call.1} parent=11 // pred_region
          %s319 = ssub.s32 1024, 1024
          %320 = vsyncadd [#allocation6], %s319
          %s321 = sshll.u32 [#allocation5], 4
          %s322 = int_to_ptr.vmem [resolvable:$true] %s321
          %327 = dma.hbm_to_vmem [thread:$0]  %s5, 1024, %s322, [#allocation6], 64, 64, 4
        $region32: #{tpu_custom_call.1} parent=11 // pred_fallthru
          _
        // Predicated region
        $region33: #{tpu_custom_call.1} parent=11 // pred_check
          %p328 = pneg %p178
        $region34: #{tpu_custom_call.1} parent=11 // pred_check_branch
          %330 = sbr.rel (%p328) target = $region36
        $region35: #{tpu_custom_call.1} parent=11 // pred_region
          %s332 = ssub.s32 1024, 1024
          %333 = vsyncadd [#allocation6], %s332
          %s334 = sshll.u32 [#allocation7], 4
          %s335 = int_to_ptr.vmem [resolvable:$true] %s334
          %340 = dma.hbm_to_vmem [thread:$0]  %s6, 1024, %s335, [#allocation6], 64, 64, 4
        $region36: #{tpu_custom_call.1} parent=11 // pred_fallthru
          _
        // Predicated region
        $region37: #{tpu_custom_call.1} parent=11 // pred_check
          %p341 = pneg %p199
        $region38: #{tpu_custom_call.1} parent=11 // pred_check_branch
          %343 = sbr.rel (%p341) target = $region40
        $region39: #{tpu_custom_call.1} parent=11 // pred_region
          %s345 = ssub.s32 512, 512
          %346 = vsyncadd [#allocation9], %s345
          %s347 = sshll.u32 [#allocation8], 4
          %s348 = int_to_ptr.vmem [resolvable:$true] %s347
          %353 = dma.hbm_to_vmem [thread:$0]  %s7, 512, %s348, [#allocation9], 64, 64, 4
        $region40: #{tpu_custom_call.1} parent=11 // pred_fallthru
          _
        // Predicated region
        $region41: #{tpu_custom_call.1} parent=11 // pred_check
          %p354 = pneg %p220
        $region42: #{tpu_custom_call.1} parent=11 // pred_check_branch
          %356 = sbr.rel (%p354) target = $region44
        $region43: #{tpu_custom_call.1} parent=11 // pred_region
          %s358 = ssub.s32 512, 512
          %359 = vsyncadd [#allocation9], %s358
          %s360 = sshll.u32 [#allocation10], 4
          %s361 = int_to_ptr.vmem [resolvable:$true] %s360
          %366 = dma.hbm_to_vmem [thread:$0]  %s8, 512, %s361, [#allocation9], 64, 64, 4
        $region44: #{tpu_custom_call.1} parent=11 // pred_fallthru
          _
        // Predicated region
        $region45: #{tpu_custom_call.1} parent=11 // pred_check
          %p367 = pneg %p241
        $region46: #{tpu_custom_call.1} parent=11 // pred_check_branch
          %369 = sbr.rel (%p367) target = $region48
        $region47: #{tpu_custom_call.1} parent=11 // pred_region
          %s371 = ssub.s32 1024, 1024
          %372 = vsyncadd [#allocation12], %s371
          %s373 = sshll.u32 [#allocation11], 4
          %s374 = int_to_ptr.vmem [resolvable:$true] %s373
          %379 = dma.hbm_to_vmem [thread:$0]  %s9, 1024, %s374, [#allocation12], 64, 64, 4
        $region48: #{tpu_custom_call.1} parent=11 // pred_fallthru
          _
        // Predicated region
        $region49: #{tpu_custom_call.1} parent=11 // pred_check
          %p380 = pneg %p262
        $region50: #{tpu_custom_call.1} parent=11 // pred_check_branch
          %382 = sbr.rel (%p380) target = $region52
        $region51: #{tpu_custom_call.1} parent=11 // pred_region
          _
        $region52: #{tpu_custom_call.1} parent=11 // pred_fallthru
          _
      $region12: #{tpu_custom_call.1} parent=5 // pred_fallthru
        _
      %p383 = scmp.lt.s32.totalorder %s26, 2
      // Predicated region
      $region53: #{tpu_custom_call.1} parent=5 // pred_check
        %p384 = pneg %p383
      $region54: #{tpu_custom_call.1} parent=5 // pred_check_branch
        %386 = sbr.rel (%p384) target = $region56
      $region55: #{tpu_custom_call.1} parent=5 // pred_region
        // Predicated region
        $region57: #{tpu_custom_call.1} parent=55 // pred_check
          %p387 = pneg %p46
        $region58: #{tpu_custom_call.1} parent=55 // pred_check_branch
          %389 = sbr.rel (%p387) target = $region60
        $region59: #{tpu_custom_call.1} parent=55 // pred_region
          %s390 = sand.u32 %s36, 1
          %s391 = scalar_lea.sflag [#allocation3], %s390
          %s392 = sand.u32 %s36, 1
          %s393 = smul.addr %s392, 64
          %s394 = scalar_lea.vmem [#allocation2], %s393
          %s396 = ssub.s32 1024, 1024
          %397 = vsyncadd %s391, %s396
          %s398 = smul.addr %s26, 128
          %s399 = scalar_lea.hbm %s0, %s398
          %s400 = sshll.u32 %s394, 4
          %s401 = int_to_ptr.vmem [resolvable:$true] %s400
          %406 = dma.hbm_to_vmem [thread:$0]  %s399, 1024, %s401, %s391, 256, 128, 8
        $region60: #{tpu_custom_call.1} parent=55 // pred_fallthru
          _
      $region56: #{tpu_custom_call.1} parent=5 // pred_fallthru
        _
      %p407 = scmp.le.s32.totalorder 1, %s26
      %p408 = scmp.lt.s32.totalorder %s26, 3
      %p409 = pnand %p407, %p408
      %p410 = pneg %p409
      // Predicated region
      $region61: #{tpu_custom_call.1} parent=5 // pred_check
        _
      $region62: #{tpu_custom_call.1} parent=5 // pred_check_branch
        %412 = sbr.rel (%p409) target = $region64
      $region63: #{tpu_custom_call.1} parent=5 // pred_region
        %s413 = ssub.s32 %s26, 1
        %s414 = sand.u32 %s39, 1
        %s415 = scalar_lea.sflag [#allocation3], %s414
        %s416 = sand.u32 %s39, 1
        %s417 = smul.addr %s416, 64
        %s418 = scalar_lea.vmem [#allocation2], %s417
        // Predicated region
        $region65: #{tpu_custom_call.1} parent=63 // pred_check
          %p419 = pneg %p52
        $region66: #{tpu_custom_call.1} parent=63 // pred_check_branch
          %421 = sbr.rel (%p419) target = $region68
        $region67: #{tpu_custom_call.1} parent=63 // pred_region
          %422 = dma.done %s415, 1024
        $region68: #{tpu_custom_call.1} parent=63 // pred_fallthru
          _
        // Predicated region
        $region69: #{tpu_custom_call.1} parent=63 // pred_check
          %p423 = pneg %p157
        $region70: #{tpu_custom_call.1} parent=63 // pred_check_branch
          %425 = sbr.rel (%p423) target = $region72
        $region71: #{tpu_custom_call.1} parent=63 // pred_region
          %426 = dma.done [#allocation6], 1024
        $region72: #{tpu_custom_call.1} parent=63 // pred_fallthru
          _
        // Predicated region
        $region73: #{tpu_custom_call.1} parent=63 // pred_check
          %p427 = pneg %p178
        $region74: #{tpu_custom_call.1} parent=63 // pred_check_branch
          %429 = sbr.rel (%p427) target = $region76
        $region75: #{tpu_custom_call.1} parent=63 // pred_region
          %430 = dma.done [#allocation6], 1024
        $region76: #{tpu_custom_call.1} parent=63 // pred_fallthru
          _
        // Predicated region
        $region77: #{tpu_custom_call.1} parent=63 // pred_check
          %p431 = pneg %p199
        $region78: #{tpu_custom_call.1} parent=63 // pred_check_branch
          %433 = sbr.rel (%p431) target = $region80
        $region79: #{tpu_custom_call.1} parent=63 // pred_region
          %434 = dma.done [#allocation9], 512
        $region80: #{tpu_custom_call.1} parent=63 // pred_fallthru
          _
        // Predicated region
        $region81: #{tpu_custom_call.1} parent=63 // pred_check
          %p435 = pneg %p220
        $region82: #{tpu_custom_call.1} parent=63 // pred_check_branch
          %437 = sbr.rel (%p435) target = $region84
        $region83: #{tpu_custom_call.1} parent=63 // pred_region
          %438 = dma.done [#allocation9], 512
        $region84: #{tpu_custom_call.1} parent=63 // pred_fallthru
          _
        // Predicated region
        $region85: #{tpu_custom_call.1} parent=63 // pred_check
          %p439 = pneg %p241
        $region86: #{tpu_custom_call.1} parent=63 // pred_check_branch
          %441 = sbr.rel (%p439) target = $region88
        $region87: #{tpu_custom_call.1} parent=63 // pred_region
          %442 = dma.done [#allocation12], 1024
        $region88: #{tpu_custom_call.1} parent=63 // pred_fallthru
          _
        %s443 = sand.u32 %s39, 1
        %s444 = scalar_lea.sflag [#allocation3], %s443
        %s445 = sand.u32 %s39, 1
        %s446 = smul.addr %s445, 64
        %s447 = scalar_lea.vmem [#allocation2], %s446
        %p448 = pneg %p52
        %p449 = pneg %p49
        %p450 = pneg %p73
        %p451 = pneg %p70
        %p452 = pneg %p94
        %p453 = pneg %p91
        %p454 = pneg %p115
        %p455 = pneg %p112
        %p456 = pneg %p136
        %p457 = pneg %p133
        %p458 = pneg %p157
        %p459 = pneg %p154
        %p460 = pneg %p178
        %p461 = pneg %p175
        %p462 = pneg %p199
        %p463 = pneg %p196
        %p464 = pneg %p220
        %p465 = pneg %p217
        %p466 = pneg %p241
        %p467 = pneg %p238
        %p468 = pneg %p262
        %p469 = pneg %p259
        %p470 = pneg %p288
        %p471 = pneg %p285
        %s472 = sand.u32 %s275, 1
        %s473 = scalar_lea.sflag [#allocation4], %s472
        %s474 = sand.u32 %s275, 1
        %s475 = smul.addr %s474, 64
        %s476 = scalar_lea.vmem [#allocation13], %s475
        %v478 = vld [vmem:[%s418] sm:$0xff]
        %v479 = vld [vmem:[%s418 + $0x8] sm:$0xff]
        %v480 = vld [vmem:[%s418 + $0x10] sm:$0xff]
        %v481 = vld [vmem:[%s418 + $0x18] sm:$0xff]
        %v482 = vld [vmem:[%s418 + $0x20] sm:$0xff]
        %v483 = vld [vmem:[%s418 + $0x28] sm:$0xff]
        %v484 = vld [vmem:[%s418 + $0x30] sm:$0xff]
        %v485 = vld [vmem:[%s418 + $0x38] sm:$0xff]
        %v486 = vld [vmem:[%s1] sm:$0x1]
        %v487 = vld [vmem:[%s2] sm:$0x1]
        %488 = vadd.xlane.f32.xlu0 %v478
        %v489 = vpop.xlane.xlu0 %488
        %490 = vadd.xlane.f32.xlu0 %v479
        %v491 = vpop.xlane.xlu0 %490
        %492 = vadd.xlane.f32.xlu0 %v480
        %v493 = vpop.xlane.xlu0 %492
        %494 = vadd.xlane.f32.xlu0 %v481
        %v495 = vpop.xlane.xlu0 %494
        %496 = vadd.xlane.f32.xlu0 %v482
        %v497 = vpop.xlane.xlu0 %496
        %498 = vadd.xlane.f32.xlu0 %v483
        %v499 = vpop.xlane.xlu0 %498
        %500 = vadd.xlane.f32.xlu0 %v484
        %v501 = vpop.xlane.xlu0 %500
        %502 = vadd.xlane.f32.xlu0 %v485
        %v503 = vpop.xlane.xlu0 %502
        %v504 = vrcp.pop 128.0
        %v505 = vmul.f32 %v489, %v504
        %v506 = vmul.f32 %v491, %v504
        %v507 = vmul.f32 %v493, %v504
        %v508 = vmul.f32 %v495, %v504
        %v509 = vmul.f32 %v497, %v504
        %v510 = vmul.f32 %v499, %v504
        %v511 = vmul.f32 %v501, %v504
        %v512 = vmul.f32 %v503, %v504
        %v513 = vsub.f32 %v478, %v505
        %v514 = vsub.f32 %v479, %v506
        %v515 = vsub.f32 %v480, %v507
        %v516 = vsub.f32 %v481, %v508
        %v517 = vsub.f32 %v482, %v509
        %v518 = vsub.f32 %v483, %v510
        %v519 = vsub.f32 %v484, %v511
        %v520 = vsub.f32 %v485, %v512
        %v521 = vmul.f32 %v513, %v513
        %v522 = vmul.f32 %v514, %v514
        %v523 = vmul.f32 %v515, %v515
        %v524 = vmul.f32 %v516, %v516
        %v525 = vmul.f32 %v517, %v517
        %v526 = vmul.f32 %v518, %v518
        %v527 = vmul.f32 %v519, %v519
        %v528 = vmul.f32 %v520, %v520
        %529 = vadd.xlane.f32.xlu0 %v521
        %v530 = vpop.xlane.xlu0 %529
        %531 = vadd.xlane.f32.xlu0 %v522
        %v532 = vpop.xlane.xlu0 %531
        %533 = vadd.xlane.f32.xlu0 %v523
        %v534 = vpop.xlane.xlu0 %533
        %535 = vadd.xlane.f32.xlu0 %v524
        %v536 = vpop.xlane.xlu0 %535
        %537 = vadd.xlane.f32.xlu0 %v525
        %v538 = vpop.xlane.xlu0 %537
        %539 = vadd.xlane.f32.xlu0 %v526
        %v540 = vpop.xlane.xlu0 %539
        %541 = vadd.xlane.f32.xlu0 %v527
        %v542 = vpop.xlane.xlu0 %541
        %543 = vadd.xlane.f32.xlu0 %v528
        %v544 = vpop.xlane.xlu0 %543
        %v545 = vmul.f32 %v530, %v504
        %v546 = vmul.f32 %v532, %v504
        %v547 = vmul.f32 %v534, %v504
        %v548 = vmul.f32 %v536, %v504
        %v549 = vmul.f32 %v538, %v504
        %v550 = vmul.f32 %v540, %v504
        %v551 = vmul.f32 %v542, %v504
        %v552 = vmul.f32 %v544, %v504
        %v553 = vadd.f32 %v545, 1e-05
        %v554 = vadd.f32 %v546, 1e-05
        %v555 = vadd.f32 %v547, 1e-05
        %v556 = vadd.f32 %v548, 1e-05
        %v557 = vadd.f32 %v549, 1e-05
        %v558 = vadd.f32 %v550, 1e-05
        %v559 = vadd.f32 %v551, 1e-05
        %v560 = vadd.f32 %v552, 1e-05
        %v561 = vrsqrt.pop %v553
        %v562 = vrsqrt.pop %v554
        %v563 = vrsqrt.pop %v555
        %v564 = vrsqrt.pop %v556
        %v565 = vrsqrt.pop %v557
        %v566 = vrsqrt.pop %v558
        %v567 = vrsqrt.pop %v559
        %v568 = vrsqrt.pop %v560
        %v569 = vmul.f32 %v513, %v561
        %v570 = vmul.f32 %v514, %v562
        %v571 = vmul.f32 %v515, %v563
        %v572 = vmul.f32 %v516, %v564
        %v573 = vmul.f32 %v517, %v565
        %v574 = vmul.f32 %v518, %v566
        %v575 = vmul.f32 %v519, %v567
        %v576 = vmul.f32 %v520, %v568
        %v578 = vlaneseq
        %v579 = vshrl.u32 %v578, 7
        %v580 = vsub.s32 0, %v579
        %v581 = vrot.slane %v486, %v580
        %v583 = vmul.f32 %v569, %v581
        %v584 = vmul.f32 %v570, %v581
        %v585 = vmul.f32 %v571, %v581
        %v586 = vmul.f32 %v572, %v581
        %v587 = vmul.f32 %v573, %v581
        %v588 = vmul.f32 %v574, %v581
        %v589 = vmul.f32 %v575, %v581
        %v590 = vmul.f32 %v576, %v581
        %v592 = vlaneseq
        %v593 = vshrl.u32 %v592, 7
        %v594 = vsub.s32 0, %v593
        %v595 = vrot.slane %v487, %v594
        %v597 = vadd.f32 %v583, %v595
        %v598 = vadd.f32 %v584, %v595
        %v599 = vadd.f32 %v585, %v595
        %v600 = vadd.f32 %v586, %v595
        %v601 = vadd.f32 %v587, %v595
        %v602 = vadd.f32 %v588, %v595
        %v603 = vadd.f32 %v589, %v595
        %v604 = vadd.f32 %v590, %v595
        %v605 = vpack.c.bf16 %v598, %v597
        %v606 = vpack.c.bf16 %v600, %v599
        %v607 = vpack.c.bf16 %v602, %v601
        %v608 = vpack.c.bf16 %v604, %v603
        %v609 = vld [vmem:[#allocation5] sm:$0xf]
        %v610 = vld [vmem:[#allocation5 + $0x4] sm:$0xf]
        %v611 = vld [vmem:[#allocation5 + $0x8] sm:$0xf]
        %v612 = vld [vmem:[#allocation5 + $0xc] sm:$0xf]
        %v613 = vld [vmem:[#allocation5 + $0x10] sm:$0xf]
        %v614 = vld [vmem:[#allocation5 + $0x14] sm:$0xf]
        %v615 = vld [vmem:[#allocation5 + $0x18] sm:$0xf]
        %v616 = vld [vmem:[#allocation5 + $0x1c] sm:$0xf]
        %v617 = vld [vmem:[#allocation5 + $0x20] sm:$0xf]
        %v618 = vld [vmem:[#allocation5 + $0x24] sm:$0xf]
        %v619 = vld [vmem:[#allocation5 + $0x28] sm:$0xf]
        %v620 = vld [vmem:[#allocation5 + $0x2c] sm:$0xf]
        %v621 = vld [vmem:[#allocation5 + $0x30] sm:$0xf]
        %v622 = vld [vmem:[#allocation5 + $0x34] sm:$0xf]
        %v623 = vld [vmem:[#allocation5 + $0x38] sm:$0xf]
        %v624 = vld [vmem:[#allocation5 + $0x3c] sm:$0xf]
        %v641 = vunpack.c.l.b16 %v609
        %v642 = vunpack.c.l.b16 %v610
        %v643 = vunpack.c.l.b16 %v611
        %v644 = vunpack.c.l.b16 %v612
        %v645 = vunpack.c.l.b16 %v613
        %v646 = vunpack.c.l.b16 %v614
        %v647 = vunpack.c.l.b16 %v615
        %v648 = vunpack.c.l.b16 %v616
        %v649 = vunpack.c.l.b16 %v617
        %v650 = vunpack.c.l.b16 %v618
        %v651 = vunpack.c.l.b16 %v619
        %v652 = vunpack.c.l.b16 %v620
        %v653 = vunpack.c.l.b16 %v621
        %v654 = vunpack.c.l.b16 %v622
        %v655 = vunpack.c.l.b16 %v623
        %v656 = vunpack.c.l.b16 %v624
        %v657 = vpack.c.b16 %v642, %v641
        %v658 = vpack.c.b16 %v644, %v643
        %v659 = vpack.c.b16 %v646, %v645
        %v660 = vpack.c.b16 %v648, %v647
        %v661 = vpack.c.b16 %v650, %v649
        %v662 = vpack.c.b16 %v652, %v651
        %v663 = vpack.c.b16 %v654, %v653
        %v664 = vpack.c.b16 %v656, %v655
        %673 = vmatprep.subr.bf16.mxu0 0
        %674 = vmatpush1.bf16.msra.mxu0 %v664
        %675 = vmatprep.subr.bf16.mxu0 0
        %676 = vmatpush1.bf16.msra.mxu0 %v663
        %677 = vmatprep.subr.bf16.mxu0 0
        %678 = vmatpush1.bf16.msra.mxu0 %v662
        %679 = vmatprep.subr.bf16.mxu0 0
        %680 = vmatpush1.bf16.msra.mxu0 %v661
        %681 = vmatprep.subr.bf16.mxu0 0
        %682 = vmatpush1.bf16.msra.mxu0 %v660
        %683 = vmatprep.subr.bf16.mxu0 0
        %684 = vmatpush1.bf16.msra.mxu0 %v659
        %685 = vmatprep.subr.bf16.mxu0 0
        %686 = vmatpush1.bf16.msra.mxu0 %v658
        %687 = vmatprep.subr.bf16.mxu0 0
        %688 = vmatpush1.bf16.msra.mxu0 %v657
        %689 = vmatprep.subr.bf16.mxu0 0
        %690 = vmatpush2.bf16.msra.mxu0 0
        %691 = vmatprep.subr.bf16.mxu0 0
        %692 = vmatpush2.bf16.msra.mxu0 0
        %693 = vmatprep.subr.bf16.mxu0 0
        %694 = vmatpush2.bf16.msra.mxu0 0
        %695 = vmatprep.subr.bf16.mxu0 0
        %696 = vmatpush2.bf16.msra.mxu0 0
        %697 = vmatprep.subr.bf16.mxu0 0
        %698 = vmatpush2.bf16.msra.mxu0 0
        %699 = vmatprep.subr.bf16.mxu0 0
        %700 = vmatpush2.bf16.msra.mxu0 0
        %701 = vmatprep.subr.bf16.mxu0 0
        %702 = vmatpush2.bf16.msra.mxu0 0
        %703 = vmatprep.subr.bf16.mxu0 0
        %704 = vmatpush2.bf16.msra.mxu0 0
        %705 = vmatprep.mubr.bf16.mxu0 0
        %706 = vmatmul.mubr.bf16.gmra.mxu0 %v605
        %v707 = vpop.f32.mrf.mxu0
        %v708 = vadd.f32 0.0, %v707
        %v709 = vpop.f32.mrf.mxu0
        %v710 = vpop.f32.mrf.mxu0
        %v711 = vadd.f32 0.0, %v710
        %v712 = vpop.f32.mrf.mxu0
        %713 = vmatprep.mubr.bf16.mxu0 0
        %714 = vmatmul.mubr.bf16.gmra.mxu0 %v606
        %v715 = vpop.f32.mrf.mxu0
        %v716 = vadd.f32 0.0, %v715
        %v717 = vpop.f32.mrf.mxu0
        %v718 = vpop.f32.mrf.mxu0
        %v719 = vadd.f32 0.0, %v718
        %v720 = vpop.f32.mrf.mxu0
        %721 = vmatprep.mubr.bf16.mxu0 0
        %722 = vmatmul.mubr.bf16.gmra.mxu0 %v607
        %v723 = vpop.f32.mrf.mxu0
        %v724 = vadd.f32 0.0, %v723
        %v725 = vpop.f32.mrf.mxu0
        %v726 = vpop.f32.mrf.mxu0
        %v727 = vadd.f32 0.0, %v726
        %v728 = vpop.f32.mrf.mxu0
        %729 = vmatprep.mubr.bf16.mxu0 0
        %730 = vmatmul.mubr.bf16.gmra.mxu0 %v608
        %v731 = vpop.f32.mrf.mxu0
        %v732 = vadd.f32 0.0, %v731
        %v733 = vpop.f32.mrf.mxu0
        %v734 = vpop.f32.mrf.mxu0
        %v735 = vadd.f32 0.0, %v734
        %v736 = vpop.f32.mrf.mxu0
        %737 = vdwg.mxu0
        %v738 = vld [vmem:[#allocation7] sm:$0xf]
        %v739 = vld [vmem:[#allocation7 + $0x4] sm:$0xf]
        %v740 = vld [vmem:[#allocation7 + $0x8] sm:$0xf]
        %v741 = vld [vmem:[#allocation7 + $0xc] sm:$0xf]
        %v742 = vld [vmem:[#allocation7 + $0x10] sm:$0xf]
        %v743 = vld [vmem:[#allocation7 + $0x14] sm:$0xf]
        %v744 = vld [vmem:[#allocation7 + $0x18] sm:$0xf]
        %v745 = vld [vmem:[#allocation7 + $0x1c] sm:$0xf]
        %v746 = vld [vmem:[#allocation7 + $0x20] sm:$0xf]
        %v747 = vld [vmem:[#allocation7 + $0x24] sm:$0xf]
        %v748 = vld [vmem:[#allocation7 + $0x28] sm:$0xf]
        %v749 = vld [vmem:[#allocation7 + $0x2c] sm:$0xf]
        %v750 = vld [vmem:[#allocation7 + $0x30] sm:$0xf]
        %v751 = vld [vmem:[#allocation7 + $0x34] sm:$0xf]
        %v752 = vld [vmem:[#allocation7 + $0x38] sm:$0xf]
        %v753 = vld [vmem:[#allocation7 + $0x3c] sm:$0xf]
        %v770 = vunpack.c.l.b16 %v738
        %v771 = vunpack.c.l.b16 %v739
        %v772 = vunpack.c.l.b16 %v740
        %v773 = vunpack.c.l.b16 %v741
        %v774 = vunpack.c.l.b16 %v742
        %v775 = vunpack.c.l.b16 %v743
        %v776 = vunpack.c.l.b16 %v744
        %v777 = vunpack.c.l.b16 %v745
        %v778 = vunpack.c.l.b16 %v746
        %v779 = vunpack.c.l.b16 %v747
        %v780 = vunpack.c.l.b16 %v748
        %v781 = vunpack.c.l.b16 %v749
        %v782 = vunpack.c.l.b16 %v750
        %v783 = vunpack.c.l.b16 %v751
        %v784 = vunpack.c.l.b16 %v752
        %v785 = vunpack.c.l.b16 %v753
        %v786 = vpack.c.b16 %v771, %v770
        %v787 = vpack.c.b16 %v773, %v772
        %v788 = vpack.c.b16 %v775, %v774
        %v789 = vpack.c.b16 %v777, %v776
        %v790 = vpack.c.b16 %v779, %v778
        %v791 = vpack.c.b16 %v781, %v780
        %v792 = vpack.c.b16 %v783, %v782
        %v793 = vpack.c.b16 %v785, %v784
        %802 = vmatprep.subr.bf16.mxu0 0
        %803 = vmatpush1.bf16.msra.mxu0 %v793
        %804 = vmatprep.subr.bf16.mxu0 0
        %805 = vmatpush1.bf16.msra.mxu0 %v792
        %806 = vmatprep.subr.bf16.mxu0 0
        %807 = vmatpush1.bf16.msra.mxu0 %v791
        %808 = vmatprep.subr.bf16.mxu0 0
        %809 = vmatpush1.bf16.msra.mxu0 %v790
        %810 = vmatprep.subr.bf16.mxu0 0
        %811 = vmatpush1.bf16.msra.mxu0 %v789
        %812 = vmatprep.subr.bf16.mxu0 0
        %813 = vmatpush1.bf16.msra.mxu0 %v788
        %814 = vmatprep.subr.bf16.mxu0 0
        %815 = vmatpush1.bf16.msra.mxu0 %v787
        %816 = vmatprep.subr.bf16.mxu0 0
        %817 = vmatpush1.bf16.msra.mxu0 %v786
        %818 = vmatprep.subr.bf16.mxu0 0
        %819 = vmatpush2.bf16.msra.mxu0 0
        %820 = vmatprep.subr.bf16.mxu0 0
        %821 = vmatpush2.bf16.msra.mxu0 0
        %822 = vmatprep.subr.bf16.mxu0 0
        %823 = vmatpush2.bf16.msra.mxu0 0
        %824 = vmatprep.subr.bf16.mxu0 0
        %825 = vmatpush2.bf16.msra.mxu0 0
        %826 = vmatprep.subr.bf16.mxu0 0
        %827 = vmatpush2.bf16.msra.mxu0 0
        %828 = vmatprep.subr.bf16.mxu0 0
        %829 = vmatpush2.bf16.msra.mxu0 0
        %830 = vmatprep.subr.bf16.mxu0 0
        %831 = vmatpush2.bf16.msra.mxu0 0
        %832 = vmatprep.subr.bf16.mxu0 0
        %833 = vmatpush2.bf16.msra.mxu0 0
        %834 = vmatprep.mubr.bf16.mxu0 0
        %835 = vmatmul.mubr.bf16.gmra.mxu0 %v605
        %v836 = vpop.f32.mrf.mxu0
        %v837 = vadd.f32 0.0, %v836
        %v838 = vpop.f32.mrf.mxu0
        %v839 = vpop.f32.mrf.mxu0
        %v840 = vadd.f32 0.0, %v839
        %v841 = vpop.f32.mrf.mxu0
        %842 = vmatprep.mubr.bf16.mxu0 0
        %843 = vmatmul.mubr.bf16.gmra.mxu0 %v606
        %v844 = vpop.f32.mrf.mxu0
        %v845 = vadd.f32 0.0, %v844
        %v846 = vpop.f32.mrf.mxu0
        %v847 = vpop.f32.mrf.mxu0
        %v848 = vadd.f32 0.0, %v847
        %v849 = vpop.f32.mrf.mxu0
        %850 = vmatprep.mubr.bf16.mxu0 0
        %851 = vmatmul.mubr.bf16.gmra.mxu0 %v607
        %v852 = vpop.f32.mrf.mxu0
        %v853 = vadd.f32 0.0, %v852
        %v854 = vpop.f32.mrf.mxu0
        %v855 = vpop.f32.mrf.mxu0
        %v856 = vadd.f32 0.0, %v855
        %v857 = vpop.f32.mrf.mxu0
        %858 = vmatprep.mubr.bf16.mxu0 0
        %859 = vmatmul.mubr.bf16.gmra.mxu0 %v608
        %v860 = vpop.f32.mrf.mxu0
        %v861 = vadd.f32 0.0, %v860
        %v862 = vpop.f32.mrf.mxu0
        %v863 = vpop.f32.mrf.mxu0
        %v864 = vadd.f32 0.0, %v863
        %v865 = vpop.f32.mrf.mxu0
        %866 = vdwg.mxu0
        %v867 = vld [vmem:[#allocation8] sm:$0xf]
        %v868 = vld [vmem:[#allocation8 + $0x4] sm:$0xf]
        %v869 = vld [vmem:[#allocation8 + $0x8] sm:$0xf]
        %v870 = vld [vmem:[#allocation8 + $0xc] sm:$0xf]
        %v871 = vld [vmem:[#allocation8 + $0x10] sm:$0xf]
        %v872 = vld [vmem:[#allocation8 + $0x14] sm:$0xf]
        %v873 = vld [vmem:[#allocation8 + $0x18] sm:$0xf]
        %v874 = vld [vmem:[#allocation8 + $0x1c] sm:$0xf]
        %v875 = vpack.c.bf16 %v711, %v708
        %v876 = vpack.c.bf16 %v719, %v716
        %v877 = vpack.c.bf16 %v727, %v724
        %v878 = vpack.c.bf16 %v735, %v732
        %v887 = vunpack.c.l.b16 %v867
        %v888 = vunpack.c.l.b16 %v868
        %v889 = vunpack.c.l.b16 %v869
        %v890 = vunpack.c.l.b16 %v870
        %v891 = vunpack.c.l.b16 %v871
        %v892 = vunpack.c.l.b16 %v872
        %v893 = vunpack.c.l.b16 %v873
        %v894 = vunpack.c.l.b16 %v874
        %v895 = vpack.c.b16 %v888, %v887
        %v896 = vpack.c.b16 %v890, %v889
        %v897 = vpack.c.b16 %v892, %v891
        %v898 = vpack.c.b16 %v894, %v893
        %vm899 = vcmask 523264
        %v901 = vsel %vm899, %v895, 0
        %v904 = vsel %vm899, %v896, 0
        %v907 = vsel %vm899, %v897, 0
        %v910 = vsel %vm899, %v898, 0
        %912 = vmatprep.subr.bf16.mxu0 0
        %913 = vmatpush1.bf16.msra.mxu0 0
        %914 = vmatprep.subr.bf16.mxu0 0
        %915 = vmatpush1.bf16.msra.mxu0 0
        %916 = vmatprep.subr.bf16.mxu0 0
        %917 = vmatpush1.bf16.msra.mxu0 0
        %918 = vmatprep.subr.bf16.mxu0 0
        %919 = vmatpush1.bf16.msra.mxu0 0
        %920 = vmatprep.subr.bf16.mxu0 0
        %921 = vmatpush1.bf16.msra.mxu0 %v878
        %922 = vmatprep.subr.bf16.mxu0 0
        %923 = vmatpush1.bf16.msra.mxu0 %v877
        %924 = vmatprep.subr.bf16.mxu0 0
        %925 = vmatpush1.bf16.msra.mxu0 %v876
        %926 = vmatprep.subr.bf16.mxu0 0
        %927 = vmatpush1.bf16.msra.mxu0 %v875
        %928 = vmatprep.subr.bf16.mxu0 0
        %929 = vmatpush2.bf16.msra.mxu0 0
        %930 = vmatprep.subr.bf16.mxu0 0
        %931 = vmatpush2.bf16.msra.mxu0 0
        %932 = vmatprep.subr.bf16.mxu0 0
        %933 = vmatpush2.bf16.msra.mxu0 0
        %934 = vmatprep.subr.bf16.mxu0 0
        %935 = vmatpush2.bf16.msra.mxu0 0
        %936 = vmatprep.subr.bf16.mxu0 0
        %937 = vmatpush2.bf16.msra.mxu0 0
        %938 = vmatprep.subr.bf16.mxu0 0
        %939 = vmatpush2.bf16.msra.mxu0 0
        %940 = vmatprep.subr.bf16.mxu0 0
        %941 = vmatpush2.bf16.msra.mxu0 0
        %942 = vmatprep.subr.bf16.mxu0 0
        %943 = vmatpush2.bf16.msra.mxu0 0
        %944 = vmatprep.mubr.bf16.mxu0 0
        %945 = vmatmul.mubr.bf16.gmra.mxu0 %v901
        %v946 = vpop.f32.mrf.mxu0
        %v947 = vadd.f32 0.0, %v946
        %v948 = vpop.f32.mrf.mxu0
        %v949 = vpop.f32.mrf.mxu0
        %v950 = vadd.f32 0.0, %v949
        %v951 = vpop.f32.mrf.mxu0
        %952 = vmatprep.mubr.bf16.mxu0 0
        %953 = vmatmul.mubr.bf16.gmra.mxu0 %v904
        %v954 = vpop.f32.mrf.mxu0
        %v955 = vadd.f32 0.0, %v954
        %v956 = vpop.f32.mrf.mxu0
        %v957 = vpop.f32.mrf.mxu0
        %v958 = vadd.f32 0.0, %v957
        %v959 = vpop.f32.mrf.mxu0
        %960 = vmatprep.mubr.bf16.mxu0 0
        %961 = vmatmul.mubr.bf16.gmra.mxu0 %v907
        %v962 = vpop.f32.mrf.mxu0
        %v963 = vadd.f32 0.0, %v962
        %v964 = vpop.f32.mrf.mxu0
        %v965 = vpop.f32.mrf.mxu0
        %v966 = vadd.f32 0.0, %v965
        %v967 = vpop.f32.mrf.mxu0
        %968 = vmatprep.mubr.bf16.mxu0 0
        %969 = vmatmul.mubr.bf16.gmra.mxu0 %v910
        %v970 = vpop.f32.mrf.mxu0
        %v971 = vadd.f32 0.0, %v970
        %v972 = vpop.f32.mrf.mxu0
        %v973 = vpop.f32.mrf.mxu0
        %v974 = vadd.f32 0.0, %v973
        %v975 = vpop.f32.mrf.mxu0
        %976 = vdwg.mxu0
        %v977 = vld [vmem:[#allocation10] sm:$0xf]
        %v978 = vld [vmem:[#allocation10 + $0x4] sm:$0xf]
        %v979 = vld [vmem:[#allocation10 + $0x8] sm:$0xf]
        %v980 = vld [vmem:[#allocation10 + $0xc] sm:$0xf]
        %v981 = vld [vmem:[#allocation10 + $0x10] sm:$0xf]
        %v982 = vld [vmem:[#allocation10 + $0x14] sm:$0xf]
        %v983 = vld [vmem:[#allocation10 + $0x18] sm:$0xf]
        %v984 = vld [vmem:[#allocation10 + $0x1c] sm:$0xf]
        %v985 = vpack.c.bf16 %v840, %v837
        %v986 = vpack.c.bf16 %v848, %v845
        %v987 = vpack.c.bf16 %v856, %v853
        %v988 = vpack.c.bf16 %v864, %v861
        %v997 = vunpack.c.l.b16 %v977
        %v998 = vunpack.c.l.b16 %v978
        %v999 = vunpack.c.l.b16 %v979
        %v1000 = vunpack.c.l.b16 %v980
        %v1001 = vunpack.c.l.b16 %v981
        %v1002 = vunpack.c.l.b16 %v982
        %v1003 = vunpack.c.l.b16 %v983
        %v1004 = vunpack.c.l.b16 %v984
        %v1005 = vpack.c.b16 %v998, %v997
        %v1006 = vpack.c.b16 %v1000, %v999
        %v1007 = vpack.c.b16 %v1002, %v1001
        %v1008 = vpack.c.b16 %v1004, %v1003
        %v1010 = vsel %vm899, %v1005, 0
        %v1013 = vsel %vm899, %v1006, 0
        %v1016 = vsel %vm899, %v1007, 0
        %v1019 = vsel %vm899, %v1008, 0
        %1021 = vmatprep.subr.bf16.mxu0 0
        %1022 = vmatpush1.bf16.msra.mxu0 0
        %1023 = vmatprep.subr.bf16.mxu0 0
        %1024 = vmatpush1.bf16.msra.mxu0 0
        %1025 = vmatprep.subr.bf16.mxu0 0
        %1026 = vmatpush1.bf16.msra.mxu0 0
        %1027 = vmatprep.subr.bf16.mxu0 0
        %1028 = vmatpush1.bf16.msra.mxu0 0
        %1029 = vmatprep.subr.bf16.mxu0 0
        %1030 = vmatpush1.bf16.msra.mxu0 %v988
        %1031 = vmatprep.subr.bf16.mxu0 0
        %1032 = vmatpush1.bf16.msra.mxu0 %v987
        %1033 = vmatprep.subr.bf16.mxu0 0
        %1034 = vmatpush1.bf16.msra.mxu0 %v986
        %1035 = vmatprep.subr.bf16.mxu0 0
        %1036 = vmatpush1.bf16.msra.mxu0 %v985
        %1037 = vmatprep.subr.bf16.mxu0 0
        %1038 = vmatpush2.bf16.msra.mxu0 0
        %1039 = vmatprep.subr.bf16.mxu0 0
        %1040 = vmatpush2.bf16.msra.mxu0 0
        %1041 = vmatprep.subr.bf16.mxu0 0
        %1042 = vmatpush2.bf16.msra.mxu0 0
        %1043 = vmatprep.subr.bf16.mxu0 0
        %1044 = vmatpush2.bf16.msra.mxu0 0
        %1045 = vmatprep.subr.bf16.mxu0 0
        %1046 = vmatpush2.bf16.msra.mxu0 0
        %1047 = vmatprep.subr.bf16.mxu0 0
        %1048 = vmatpush2.bf16.msra.mxu0 0
        %1049 = vmatprep.subr.bf16.mxu0 0
        %1050 = vmatpush2.bf16.msra.mxu0 0
        %1051 = vmatprep.subr.bf16.mxu0 0
        %1052 = vmatpush2.bf16.msra.mxu0 0
        %1053 = vmatprep.mubr.bf16.mxu0 0
        %1054 = vmatmul.mubr.bf16.gmra.mxu0 %v1010
        %v1055 = vpop.f32.mrf.mxu0
        %v1056 = vadd.f32 0.0, %v1055
        %v1057 = vpop.f32.mrf.mxu0
        %v1058 = vpop.f32.mrf.mxu0
        %v1059 = vadd.f32 0.0, %v1058
        %v1060 = vpop.f32.mrf.mxu0
        %1061 = vmatprep.mubr.bf16.mxu0 0
        %1062 = vmatmul.mubr.bf16.gmra.mxu0 %v1013
        %v1063 = vpop.f32.mrf.mxu0
        %v1064 = vadd.f32 0.0, %v1063
        %v1065 = vpop.f32.mrf.mxu0
        %v1066 = vpop.f32.mrf.mxu0
        %v1067 = vadd.f32 0.0, %v1066
        %v1068 = vpop.f32.mrf.mxu0
        %1069 = vmatprep.mubr.bf16.mxu0 0
        %1070 = vmatmul.mubr.bf16.gmra.mxu0 %v1016
        %v1071 = vpop.f32.mrf.mxu0
        %v1072 = vadd.f32 0.0, %v1071
        %v1073 = vpop.f32.mrf.mxu0
        %v1074 = vpop.f32.mrf.mxu0
        %v1075 = vadd.f32 0.0, %v1074
        %v1076 = vpop.f32.mrf.mxu0
        %1077 = vmatprep.mubr.bf16.mxu0 0
        %1078 = vmatmul.mubr.bf16.gmra.mxu0 %v1019
        %v1079 = vpop.f32.mrf.mxu0
        %v1080 = vadd.f32 0.0, %v1079
        %v1081 = vpop.f32.mrf.mxu0
        %v1082 = vpop.f32.mrf.mxu0
        %v1083 = vadd.f32 0.0, %v1082
        %v1084 = vpop.f32.mrf.mxu0
        %1085 = vdwg.mxu0
        %v1086 = vsub.f32 %v947, %v1056
        %v1087 = vsub.f32 %v950, %v1059
        %v1088 = vsub.f32 %v955, %v1064
        %v1089 = vsub.f32 %v958, %v1067
        %v1090 = vsub.f32 %v963, %v1072
        %v1091 = vsub.f32 %v966, %v1075
        %v1092 = vsub.f32 %v971, %v1080
        %v1093 = vsub.f32 %v974, %v1083
        %v1094 = vadd.f32 %v1086, %v478
        %v1095 = vadd.f32 %v1087, %v479
        %v1096 = vadd.f32 %v1088, %v480
        %v1097 = vadd.f32 %v1089, %v481
        %v1098 = vadd.f32 %v1090, %v482
        %v1099 = vadd.f32 %v1091, %v483
        %v1100 = vadd.f32 %v1092, %v484
        %v1101 = vadd.f32 %v1093, %v485
        %v1102 = vld [vmem:[%s3] sm:$0x1]
        %v1103 = vld [vmem:[%s4] sm:$0x1]
        %1104 = vadd.xlane.f32.xlu0 %v1094
        %v1105 = vpop.xlane.xlu0 %1104
        %1106 = vadd.xlane.f32.xlu0 %v1095
        %v1107 = vpop.xlane.xlu0 %1106
        %1108 = vadd.xlane.f32.xlu0 %v1096
        %v1109 = vpop.xlane.xlu0 %1108
        %1110 = vadd.xlane.f32.xlu0 %v1097
        %v1111 = vpop.xlane.xlu0 %1110
        %1112 = vadd.xlane.f32.xlu0 %v1098
        %v1113 = vpop.xlane.xlu0 %1112
        %1114 = vadd.xlane.f32.xlu0 %v1099
        %v1115 = vpop.xlane.xlu0 %1114
        %1116 = vadd.xlane.f32.xlu0 %v1100
        %v1117 = vpop.xlane.xlu0 %1116
        %1118 = vadd.xlane.f32.xlu0 %v1101
        %v1119 = vpop.xlane.xlu0 %1118
        %v1120 = vmul.f32 %v1105, %v504
        %v1121 = vmul.f32 %v1107, %v504
        %v1122 = vmul.f32 %v1109, %v504
        %v1123 = vmul.f32 %v1111, %v504
        %v1124 = vmul.f32 %v1113, %v504
        %v1125 = vmul.f32 %v1115, %v504
        %v1126 = vmul.f32 %v1117, %v504
        %v1127 = vmul.f32 %v1119, %v504
        %v1128 = vsub.f32 %v1094, %v1120
        %v1129 = vsub.f32 %v1095, %v1121
        %v1130 = vsub.f32 %v1096, %v1122
        %v1131 = vsub.f32 %v1097, %v1123
        %v1132 = vsub.f32 %v1098, %v1124
        %v1133 = vsub.f32 %v1099, %v1125
        %v1134 = vsub.f32 %v1100, %v1126
        %v1135 = vsub.f32 %v1101, %v1127
        %v1136 = vmul.f32 %v1128, %v1128
        %v1137 = vmul.f32 %v1129, %v1129
        %v1138 = vmul.f32 %v1130, %v1130
        %v1139 = vmul.f32 %v1131, %v1131
        %v1140 = vmul.f32 %v1132, %v1132
        %v1141 = vmul.f32 %v1133, %v1133
        %v1142 = vmul.f32 %v1134, %v1134
        %v1143 = vmul.f32 %v1135, %v1135
        %1144 = vadd.xlane.f32.xlu0 %v1136
        %v1145 = vpop.xlane.xlu0 %1144
        %1146 = vadd.xlane.f32.xlu0 %v1137
        %v1147 = vpop.xlane.xlu0 %1146
        %1148 = vadd.xlane.f32.xlu0 %v1138
        %v1149 = vpop.xlane.xlu0 %1148
        %1150 = vadd.xlane.f32.xlu0 %v1139
        %v1151 = vpop.xlane.xlu0 %1150
        %1152 = vadd.xlane.f32.xlu0 %v1140
        %v1153 = vpop.xlane.xlu0 %1152
        %1154 = vadd.xlane.f32.xlu0 %v1141
        %v1155 = vpop.xlane.xlu0 %1154
        %1156 = vadd.xlane.f32.xlu0 %v1142
        %v1157 = vpop.xlane.xlu0 %1156
        %1158 = vadd.xlane.f32.xlu0 %v1143
        %v1159 = vpop.xlane.xlu0 %1158
        %v1160 = vmul.f32 %v1145, %v504
        %v1161 = vmul.f32 %v1147, %v504
        %v1162 = vmul.f32 %v1149, %v504
        %v1163 = vmul.f32 %v1151, %v504
        %v1164 = vmul.f32 %v1153, %v504
        %v1165 = vmul.f32 %v1155, %v504
        %v1166 = vmul.f32 %v1157, %v504
        %v1167 = vmul.f32 %v1159, %v504
        %v1168 = vadd.f32 %v1160, 1e-05
        %v1169 = vadd.f32 %v1161, 1e-05
        %v1170 = vadd.f32 %v1162, 1e-05
        %v1171 = vadd.f32 %v1163, 1e-05
        %v1172 = vadd.f32 %v1164, 1e-05
        %v1173 = vadd.f32 %v1165, 1e-05
        %v1174 = vadd.f32 %v1166, 1e-05
        %v1175 = vadd.f32 %v1167, 1e-05
        %v1176 = vrsqrt.pop %v1168
        %v1177 = vrsqrt.pop %v1169
        %v1178 = vrsqrt.pop %v1170
        %v1179 = vrsqrt.pop %v1171
        %v1180 = vrsqrt.pop %v1172
        %v1181 = vrsqrt.pop %v1173
        %v1182 = vrsqrt.pop %v1174
        %v1183 = vrsqrt.pop %v1175
        %v1184 = vmul.f32 %v1128, %v1176
        %v1185 = vmul.f32 %v1129, %v1177
        %v1186 = vmul.f32 %v1130, %v1178
        %v1187 = vmul.f32 %v1131, %v1179
        %v1188 = vmul.f32 %v1132, %v1180
        %v1189 = vmul.f32 %v1133, %v1181
        %v1190 = vmul.f32 %v1134, %v1182
        %v1191 = vmul.f32 %v1135, %v1183
        %v1193 = vlaneseq
        %v1194 = vshrl.u32 %v1193, 7
        %v1195 = vsub.s32 0, %v1194
        %v1196 = vrot.slane %v1102, %v1195
        %v1198 = vmul.f32 %v1184, %v1196
        %v1199 = vmul.f32 %v1185, %v1196
        %v1200 = vmul.f32 %v1186, %v1196
        %v1201 = vmul.f32 %v1187, %v1196
        %v1202 = vmul.f32 %v1188, %v1196
        %v1203 = vmul.f32 %v1189, %v1196
        %v1204 = vmul.f32 %v1190, %v1196
        %v1205 = vmul.f32 %v1191, %v1196
        %v1207 = vlaneseq
        %v1208 = vshrl.u32 %v1207, 7
        %v1209 = vsub.s32 0, %v1208
        %v1210 = vrot.slane %v1103, %v1209
        %v1212 = vadd.f32 %v1198, %v1210
        %v1213 = vadd.f32 %v1199, %v1210
        %v1214 = vadd.f32 %v1200, %v1210
        %v1215 = vadd.f32 %v1201, %v1210
        %v1216 = vadd.f32 %v1202, %v1210
        %v1217 = vadd.f32 %v1203, %v1210
        %v1218 = vadd.f32 %v1204, %v1210
        %v1219 = vadd.f32 %v1205, %v1210
        %v1220 = vpack.c.bf16 %v1213, %v1212
        %v1221 = vpack.c.bf16 %v1215, %v1214
        %v1222 = vpack.c.bf16 %v1217, %v1216
        %v1223 = vpack.c.bf16 %v1219, %v1218
        %v1224 = vld [vmem:[#allocation11] sm:$0xf]
        %v1225 = vld [vmem:[#allocation11 + $0x4] sm:$0xf]
        %v1226 = vld [vmem:[#allocation11 + $0x8] sm:$0xf]
        %v1227 = vld [vmem:[#allocation11 + $0xc] sm:$0xf]
        %v1228 = vld [vmem:[#allocation11 + $0x10] sm:$0xf]
        %v1229 = vld [vmem:[#allocation11 + $0x14] sm:$0xf]
        %v1230 = vld [vmem:[#allocation11 + $0x18] sm:$0xf]
        %v1231 = vld [vmem:[#allocation11 + $0x1c] sm:$0xf]
        %v1232 = vld [vmem:[#allocation11 + $0x20] sm:$0xf]
        %v1233 = vld [vmem:[#allocation11 + $0x24] sm:$0xf]
        %v1234 = vld [vmem:[#allocation11 + $0x28] sm:$0xf]
        %v1235 = vld [vmem:[#allocation11 + $0x2c] sm:$0xf]
        %v1236 = vld [vmem:[#allocation11 + $0x30] sm:$0xf]
        %v1237 = vld [vmem:[#allocation11 + $0x34] sm:$0xf]
        %v1238 = vld [vmem:[#allocation11 + $0x38] sm:$0xf]
        %v1239 = vld [vmem:[#allocation11 + $0x3c] sm:$0xf]
        %v1240 = vld [vmem:[%s10] sm:$0x1]
        %v1242 = vlaneseq
        %v1243 = vshrl.u32 %v1242, 7
        %v1244 = vsub.s32 0, %v1243
        %v1245 = vrot.slane %v1240, %v1244
        %v1263 = vunpack.c.l.b16 %v1224
        %v1264 = vunpack.c.l.b16 %v1225
        %v1265 = vunpack.c.l.b16 %v1226
        %v1266 = vunpack.c.l.b16 %v1227
        %v1267 = vunpack.c.l.b16 %v1228
        %v1268 = vunpack.c.l.b16 %v1229
        %v1269 = vunpack.c.l.b16 %v1230
        %v1270 = vunpack.c.l.b16 %v1231
        %v1271 = vunpack.c.l.b16 %v1232
        %v1272 = vunpack.c.l.b16 %v1233
        %v1273 = vunpack.c.l.b16 %v1234
        %v1274 = vunpack.c.l.b16 %v1235
        %v1275 = vunpack.c.l.b16 %v1236
        %v1276 = vunpack.c.l.b16 %v1237
        %v1277 = vunpack.c.l.b16 %v1238
        %v1278 = vunpack.c.l.b16 %v1239
        %v1279 = vpack.c.b16 %v1264, %v1263
        %v1280 = vpack.c.b16 %v1266, %v1265
        %v1281 = vpack.c.b16 %v1268, %v1267
        %v1282 = vpack.c.b16 %v1270, %v1269
        %v1283 = vpack.c.b16 %v1272, %v1271
        %v1284 = vpack.c.b16 %v1274, %v1273
        %v1285 = vpack.c.b16 %v1276, %v1275
        %v1286 = vpack.c.b16 %v1278, %v1277
        %1295 = vmatprep.subr.bf16.mxu0 0
        %1296 = vmatpush1.bf16.msra.mxu0 %v1286
        %1297 = vmatprep.subr.bf16.mxu0 0
        %1298 = vmatpush1.bf16.msra.mxu0 %v1285
        %1299 = vmatprep.subr.bf16.mxu0 0
        %1300 = vmatpush1.bf16.msra.mxu0 %v1284
        %1301 = vmatprep.subr.bf16.mxu0 0
        %1302 = vmatpush1.bf16.msra.mxu0 %v1283
        %1303 = vmatprep.subr.bf16.mxu0 0
        %1304 = vmatpush1.bf16.msra.mxu0 %v1282
        %1305 = vmatprep.subr.bf16.mxu0 0
        %1306 = vmatpush1.bf16.msra.mxu0 %v1281
        %1307 = vmatprep.subr.bf16.mxu0 0
        %1308 = vmatpush1.bf16.msra.mxu0 %v1280
        %1309 = vmatprep.subr.bf16.mxu0 0
        %1310 = vmatpush1.bf16.msra.mxu0 %v1279
        %1311 = vmatprep.subr.bf16.mxu0 0
        %1312 = vmatpush2.bf16.msra.mxu0 0
        %1313 = vmatprep.subr.bf16.mxu0 0
        %1314 = vmatpush2.bf16.msra.mxu0 0
        %1315 = vmatprep.subr.bf16.mxu0 0
        %1316 = vmatpush2.bf16.msra.mxu0 0
        %1317 = vmatprep.subr.bf16.mxu0 0
        %1318 = vmatpush2.bf16.msra.mxu0 0
        %1319 = vmatprep.subr.bf16.mxu0 0
        %1320 = vmatpush2.bf16.msra.mxu0 0
        %1321 = vmatprep.subr.bf16.mxu0 0
        %1322 = vmatpush2.bf16.msra.mxu0 0
        %1323 = vmatprep.subr.bf16.mxu0 0
        %1324 = vmatpush2.bf16.msra.mxu0 0
        %1325 = vmatprep.subr.bf16.mxu0 0
        %1326 = vmatpush2.bf16.msra.mxu0 0
        %1327 = vmatprep.mubr.bf16.mxu0 0
        %1328 = vmatmul.mubr.bf16.gmra.mxu0 %v1220
        %v1329 = vpop.f32.mrf.mxu0
        %v1330 = vadd.f32 %v1245, %v1329
        %v1331 = vpop.f32.mrf.mxu0
        %v1332 = vpop.f32.mrf.mxu0
        %v1333 = vadd.f32 %v1245, %v1332
        %v1334 = vpop.f32.mrf.mxu0
        %1335 = vmatprep.mubr.bf16.mxu0 0
        %1336 = vmatmul.mubr.bf16.gmra.mxu0 %v1221
        %v1337 = vpop.f32.mrf.mxu0
        %v1338 = vadd.f32 %v1245, %v1337
        %v1339 = vpop.f32.mrf.mxu0
        %v1340 = vpop.f32.mrf.mxu0
        %v1341 = vadd.f32 %v1245, %v1340
        %v1342 = vpop.f32.mrf.mxu0
        %1343 = vmatprep.mubr.bf16.mxu0 0
        %1344 = vmatmul.mubr.bf16.gmra.mxu0 %v1222
        %v1345 = vpop.f32.mrf.mxu0
        %v1346 = vadd.f32 %v1245, %v1345
        %v1347 = vpop.f32.mrf.mxu0
        %v1348 = vpop.f32.mrf.mxu0
        %v1349 = vadd.f32 %v1245, %v1348
        %v1350 = vpop.f32.mrf.mxu0
        %1351 = vmatprep.mubr.bf16.mxu0 0
        %1352 = vmatmul.mubr.bf16.gmra.mxu0 %v1223
        %v1353 = vpop.f32.mrf.mxu0
        %v1354 = vadd.f32 %v1245, %v1353
        %v1355 = vpop.f32.mrf.mxu0
        %v1356 = vpop.f32.mrf.mxu0
        %v1357 = vadd.f32 %v1245, %v1356
        %v1358 = vpop.f32.mrf.mxu0
        %1359 = vdwg.mxu0
        %v1360 = vadd.f32 %v1330, %v1094
        %v1361 = vadd.f32 %v1333, %v1095
        %v1362 = vadd.f32 %v1338, %v1096
        %v1363 = vadd.f32 %v1341, %v1097
        %v1364 = vadd.f32 %v1346, %v1098
        %v1365 = vadd.f32 %v1349, %v1099
        %v1366 = vadd.f32 %v1354, %v1100
        %v1367 = vadd.f32 %v1357, %v1101
        %1368 = vst [vmem:[%s476] sm:$0xff] %v1360
        %1369 = vst [vmem:[%s476 + $0x8] sm:$0xff] %v1361
        %1370 = vst [vmem:[%s476 + $0x10] sm:$0xff] %v1362
        %1371 = vst [vmem:[%s476 + $0x18] sm:$0xff] %v1363
        %1372 = vst [vmem:[%s476 + $0x20] sm:$0xff] %v1364
        %1373 = vst [vmem:[%s476 + $0x28] sm:$0xff] %v1365
        %1374 = vst [vmem:[%s476 + $0x30] sm:$0xff] %v1366
        %1375 = vst [vmem:[%s476 + $0x38] sm:$0xff] %v1367
        %s1376 = sand.u32 %s275, 1
        %s1377 = scalar_lea.sflag [#allocation4], %s1376
        %s1378 = sand.u32 %s275, 1
        %s1379 = smul.addr %s1378, 64
        %s1380 = scalar_lea.vmem [#allocation13], %s1379
        // Predicated region
        $region89: #{tpu_custom_call.1} parent=63 // pred_check
          %p1381 = pneg %p285
        $region90: #{tpu_custom_call.1} parent=63 // pred_check_branch
          %1383 = sbr.rel (%p1381) target = $region92
        $region91: #{tpu_custom_call.1} parent=63 // pred_region
          %s1385 = ssub.s32 1024, 1024
          %1386 = vsyncadd %s1377, %s1385
          %s1387 = smul.addr %s31, 128
          %s1388 = scalar_lea.hbm %s11, %s1387
          %s1389 = sshll.u32 %s1380, 4
          %s1390 = int_to_ptr.vmem [resolvable:$true] %s1389
          %1395 = dma.vmem_to_hbm [thread:$0]  %s1390, 1024, %s1388, %s1377, 128, 256, 8
        $region92: #{tpu_custom_call.1} parent=63 // pred_fallthru
          _
      $region64: #{tpu_custom_call.1} parent=5 // pred_fallthru
        _
      %p1396 = scmp.le.s32.totalorder 2, %s26
      // Predicated region
      $region93: #{tpu_custom_call.1} parent=5 // pred_check
        %p1397 = pneg %p1396
      $region94: #{tpu_custom_call.1} parent=5 // pred_check_branch
        %1399 = sbr.rel (%p1397) target = $region96
      $region95: #{tpu_custom_call.1} parent=5 // pred_region
        %s1400 = ssub.s32 %s26, 2
        // Predicated region
        $region97: #{tpu_custom_call.1} parent=95 // pred_check
          %p1401 = pneg %p291
        $region98: #{tpu_custom_call.1} parent=95 // pred_check_branch
          %1403 = sbr.rel (%p1401) target = $region100
        $region99: #{tpu_custom_call.1} parent=95 // pred_region
          %s1404 = sand.u32 %s276, 1
          %s1405 = scalar_lea.sflag [#allocation4], %s1404
          %s1406 = sand.u32 %s276, 1
          %s1407 = smul.addr %s1406, 64
          %s1408 = scalar_lea.vmem [#allocation13], %s1407
          %1409 = dma.done %s1405, 1024
        $region100: #{tpu_custom_call.1} parent=95 // pred_fallthru
          _
      $region96: #{tpu_custom_call.1} parent=5 // pred_fallthru
        _
    $region6: #{tpu_custom_call.1} parent=1 // loop_footer
      %s30 = sadd.s32 1, %s26
    $region7: #{tpu_custom_call.1} parent=1 // loop_footer_branch
      %25 = sbr.rel target = $region3
    $region8: #{tpu_custom_call.1} parent=1 // loop_exit
      _
    %1410 = vsyncpa [#allocation3], 1
    %s1411 = scalar_lea.sflag [#allocation3], 1
    %1412 = vsyncpa %s1411, 1
    %1413 = vsyncpa [#allocation6], 1
    %1414 = vsyncpa [#allocation9], 1
    %1415 = vsyncpa [#allocation12], 1
    %1416 = vsyncpa [#allocation4], 1
    %s1417 = scalar_lea.sflag [#allocation4], 1
    %1418 = vsyncpa %s1417, 1

</llo_original>
